<compile_context>
chip_gen: v7x
topology: tpu7x:2x2x1
jax: 0.10.0
libtpu: 0.0.40
codegen_flags: <defaults>
</compile_context>

<pallas_src>
import functools
import math

import numpy as np
import jax
import jax.numpy as jnp
from jax import lax
from jax.experimental import pallas as pl
from jax.experimental.pallas import tpu as pltpu


# ---------------------------------------------------------------------------
# Fused kernel: assignment + embeddings + adjacency penalty + FC head
# ---------------------------------------------------------------------------
def _gib_fused_kernel(emb_ref, x_ref, bd_ref, seg_ref, bcol_ref, brow_ref,
                      c1w_ref, c1b_ref, c2w_ref, c2b_ref,
                      f1w_ref, f1b_ref, f2w_ref, f2b_ref,
                      out_ref, emb_stack_ref, assign_ref, pen_ref,
                      *, inv_nodes, inv_groups):
    e = emb_ref[...]                    # (N*S, DIN)
    x = x_ref[...]                      # (N*S, P)

    # cluster1 -> relu -> cluster2, all items/nodes in one MXU pass each.
    h = jnp.dot(e, c1w_ref[...], preferred_element_type=jnp.float32) + c1b_ref[...]
    h = jnp.maximum(h, 0.0)                                              # (N*S, P)
    logits = jnp.dot(h, c2w_ref[...],
                     preferred_element_type=jnp.float32) + c2b_ref[...]  # (N*S, 2)

    # 2-way softmax as sigmoid of the logit difference (saturates correctly).
    l0 = logits[:, 0:1]
    l1 = logits[:, 1:2]
    a0 = 1.0 / (1.0 + jnp.exp(l1 - l0))                                  # (N*S, 1)
    a1 = 1.0 - a0

    # assignment written with a single store (built by select, no tiny slices).
    col = lax.broadcasted_iota(jnp.int32, assign_ref.shape, 1)           # (N*S, 2)
    assign = jnp.where(col == 0, a0, a1)                                 # (N*S, 2)
    assign_ref[...] = assign

    # per-item mean embeddings via one 0/1 segment matmul each.
    seg = seg_ref[...]                                                   # (N, N*S)
    pos = jnp.dot(seg, a0 * x, preferred_element_type=jnp.float32) * inv_nodes  # (N, P)
    gra = jnp.dot(seg, x, preferred_element_type=jnp.float32) * inv_nodes        # (N, P)
    # single stacked store: rows [0:N) = pos embedding, rows [N:2N) = graph embedding
    emb_stack_ref[...] = jnp.concatenate([pos, gra], axis=0)             # (2N, P)

    # adjacency penalty: E_i = S_i^T A S_i for every item at once.
    #   bd = blockdiag(A) repeated per item, so bd @ assign stacks (A a0_i | A a1_i).
    AS = jnp.dot(bd_ref[...], assign, preferred_element_type=jnp.float32)   # (N*S, 2)
    E0 = jnp.dot(seg, a0 * AS, preferred_element_type=jnp.float32)          # (N, 2) = [e00 e01]
    E1 = jnp.dot(seg, a1 * AS, preferred_element_type=jnp.float32)          # (N, 2) = [e10 e11]
    e00 = E0[:, 0:1]
    e01 = E0[:, 1:2]
    e10 = E1[:, 0:1]
    e11 = E1[:, 1:2]
    # row-wise L1 normalize (eps=1e-5), keep the diagonal, MSE against ones(2).
    n0 = jnp.maximum(jnp.abs(e00) + jnp.abs(e01), 1e-5)
    n1 = jnp.maximum(jnp.abs(e10) + jnp.abs(e11), 1e-5)
    d0 = e00 / n0
    d1 = e11 / n1
    mse = 0.5 * ((d0 - 1.0) ** 2 + (d1 - 1.0) ** 2)                      # (N, 1)

    # group-average of the penalty, computed in-kernel from `batch`:
    #   penalty = (1/G) * sum_groups mean_{items in group} mse
    #           = sum_i mse_i / (count[batch_i] * G)
    eq = (bcol_ref[...] == brow_ref[...]).astype(jnp.float32)            # (N, N)
    counts = jnp.sum(eq, axis=1, keepdims=True)                          # (N, 1) >= 1
    pen_ref[...] = jnp.sum((inv_groups / counts) * mse, keepdims=True)   # (1, 1)

    # FC head fused as epilogue: fc1 -> relu -> dropout(eval) -> fc2.
    # TODO(synk): dropout(p=0.5) applies only in training mode; eval-mode identity here.
    hh = jnp.dot(pos, f1w_ref[...], preferred_element_type=jnp.float32) + f1b_ref[...]
    hh = jnp.maximum(hh, 0.0)
    out_ref[...] = jnp.dot(hh, f2w_ref[...],
                           preferred_element_type=jnp.float32) + f2b_ref[...]


# ---------------------------------------------------------------------------
# Wrapper: full GIBGCN forward in one pallas_call
# ---------------------------------------------------------------------------
def gibgcn_forward(params, emb, adj, batch, prot_feature, num_groups):
    N, S, DIN = emb.shape
    P = prot_feature.shape[-1]
    H = params["fc2_w"].shape[-1]
    NS = N * S

    emb2d = emb.reshape(NS, DIN)
    x2d = prot_feature.reshape(NS, P)

    # block-diagonal replication of the shared dense adjacency (one block per item)
    bd = jnp.kron(jnp.eye(N, dtype=adj.dtype), adj)                      # (NS, NS)
    # 0/1 item-membership (segment-sum) matrix; compile-time constant (numpy)
    seg = jnp.asarray(np.kron(np.eye(N, dtype=np.float32),
                              np.ones((1, S), np.float32)))              # (N, NS)
    bcol = batch.astype(jnp.int32).reshape(N, 1)
    brow = batch.astype(jnp.int32).reshape(1, N)

    kernel = functools.partial(_gib_fused_kernel,
                               inv_nodes=1.0 / S,
                               inv_groups=1.0 / num_groups)

    out_shapes = (
        jax.ShapeDtypeStruct((N, H), jnp.float32),        # out (fc head)
        jax.ShapeDtypeStruct((2 * N, P), jnp.float32),    # [pos ; graph] embeddings
        jax.ShapeDtypeStruct((NS, 2), jnp.float32),       # assignment (softmax)
        jax.ShapeDtypeStruct((1, 1), jnp.float32),        # scalar penalty
    )

    out, emb_stack, assign2d, pen = pl.pallas_call(
        kernel,
        out_shape=out_shapes,
        grid_spec=pltpu.PrefetchScalarGridSpec(
            num_scalar_prefetch=0,
            grid=(1,),
            in_specs=[
                pl.BlockSpec((NS, DIN), lambda i: (0, 0)),
                pl.BlockSpec((NS, P), lambda i: (0, 0)),
                pl.BlockSpec((NS, NS), lambda i: (0, 0)),
                pl.BlockSpec((N, NS), lambda i: (0, 0)),
                pl.BlockSpec((N, 1), lambda i: (0, 0)),
                pl.BlockSpec((1, N), lambda i: (0, 0)),
                pl.BlockSpec((DIN, P), lambda i: (0, 0)),
                pl.BlockSpec((1, P), lambda i: (0, 0)),
                pl.BlockSpec((P, 2), lambda i: (0, 0)),
                pl.BlockSpec((1, 2), lambda i: (0, 0)),
                pl.BlockSpec((P, P), lambda i: (0, 0)),
                pl.BlockSpec((1, P), lambda i: (0, 0)),
                pl.BlockSpec((P, H), lambda i: (0, 0)),
                pl.BlockSpec((1, H), lambda i: (0, 0)),
            ],
            out_specs=[
                pl.BlockSpec((N, H), lambda i: (0, 0)),
                pl.BlockSpec((2 * N, P), lambda i: (0, 0)),
                pl.BlockSpec((NS, 2), lambda i: (0, 0)),
                pl.BlockSpec((1, 1), lambda i: (0, 0)),
            ],
        ),
        compiler_params=pltpu.CompilerParams(
            dimension_semantics=("arbitrary",)),
    )(emb2d, x2d, bd, seg, bcol, brow,
      params["c1_w"], params["c1_b"], params["c2_w"], params["c2_b"],
      params["fc1_w"], params["fc1_b"], params["fc2_w"], params["fc2_b"])

    all_subgraph_embedding = emb_stack[:N]                 # (N, P)
    all_graph_embedding = emb_stack[N:]                    # (N, P)
    all_pos_penalty = pen[0, 0]
    assignment = assign2d.reshape(N, S, 2)
    return (out, all_subgraph_embedding, all_graph_embedding,
            all_pos_penalty, assignment)


# ---------------------------------------------------------------------------
# Pure-JAX reference of the PyTorch forward (eval mode) for verification
# ---------------------------------------------------------------------------
def gibgcn_reference(params, emb, adj, batch, prot_feature, num_groups):
    h = jnp.maximum(jnp.einsum("nsd,dp->nsp", emb, params["c1_w"]) + params["c1_b"], 0.0)
    logits = jnp.einsum("nsp,pc->nsc", h, params["c2_w"]) + params["c2_b"]
    a = jax.nn.softmax(logits, axis=-1)                                  # (N, S, 2)
    pos = jnp.mean(a[..., 0:1] * prot_feature, axis=1)                   # (N, P)
    gra = jnp.mean(prot_feature, axis=1)                                 # (N, P)
    new_adj = jnp.einsum("nsc,st,ntd->ncd", a, adj, a)                   # (N, 2, 2)
    denom = jnp.maximum(jnp.sum(jnp.abs(new_adj), axis=2, keepdims=True), 1e-5)
    norm = new_adj / denom
    diag = jnp.stack([norm[:, 0, 0], norm[:, 1, 1]], axis=-1)            # (N, 2)
    mse = jnp.mean((diag - 1.0) ** 2, axis=-1)                           # (N,)
    counts = jnp.sum((batch[:, None] == batch[None, :]).astype(jnp.float32), axis=1)
    pen = jnp.sum(mse / (counts * num_groups))
    hh = jnp.maximum(pos @ params["fc1_w"] + params["fc1_b"], 0.0)
    out = hh @ params["fc2_w"] + params["fc2_b"]
    return out, pos, gra, pen, a


def init_params(key, protein_dim3, hidden_dim):
    """Deterministic Linear params (stored as (in, out); y = x @ W + b)."""
    def linear(k, fan_in, fan_out):
        kw, kb = jax.random.split(k)
        bound = 1.0 / math.sqrt(fan_in)
        w = jax.random.uniform(kw, (fan_in, fan_out), jnp.float32, -bound, bound)
        b = jax.random.uniform(kb, (1, fan_out), jnp.float32, -bound, bound)
        return w, b

    k1, k2, k3, k4 = jax.random.split(key, 4)
    c1_w, c1_b = linear(k1, protein_dim3 + hidden_dim, protein_dim3)
    c2_w, c2_b = linear(k2, protein_dim3, 2)
    f1_w, f1_b = linear(k3, protein_dim3, protein_dim3)
    f2_w, f2_b = linear(k4, protein_dim3, hidden_dim)
    return dict(c1_w=c1_w, c1_b=c1_b, c2_w=c2_w, c2_b=c2_b,
                fc1_w=f1_w, fc1_b=f1_b, fc2_w=f2_w, fc2_b=f2_b)


if __name__ == "__main__":
    PROTEIN_DIM3 = 32   # protein_dim3
    HIDDEN_DIM = 32     # hidden_dim
    N_ITEMS = 8         # rows of `batch`
    S_NODES = 16        # nodes per item (edge_index graph size)
    NUM_GROUPS = 2

    key = jax.random.PRNGKey(0)
    kp, ke, kx = jax.random.split(key, 3)

    params = init_params(kp, PROTEIN_DIM3, HIDDEN_DIM)

    emb = jax.random.normal(ke, (N_ITEMS, S_NODES, PROTEIN_DIM3 + HIDDEN_DIM),
                            jnp.float32)
    prot_feature = jax.random.normal(kx, (N_ITEMS, S_NODES, PROTEIN_DIM3),
                                     jnp.float32)

    # batch: two contiguous groups of 4 items each
    batch = jnp.array([0, 0, 0, 0, 1, 1, 1, 1], dtype=jnp.int32)

    # edge_index: bidirectional ring over S_NODES nodes -> dense adjacency
    src = jnp.arange(S_NODES, dtype=jnp.int32)
    dst = (src + 1) % S_NODES
    edge_src = jnp.concatenate([src, dst])
    edge_dst = jnp.concatenate([dst, src])
    adj = jnp.zeros((S_NODES, S_NODES), jnp.float32).at[edge_src, edge_dst].set(1.0)

    fwd = jax.jit(gibgcn_forward, static_argnames=("num_groups",))
    out, sub_emb, graph_emb, pos_penalty, assignment = fwd(
        params, emb, adj, batch, prot_feature, num_groups=NUM_GROUPS)
    jax.block_until_ready((out, sub_emb, graph_emb, pos_penalty, assignment))

    # shape checks
    assert out.shape == (N_ITEMS, HIDDEN_DIM)
    assert sub_emb.shape == (N_ITEMS, PROTEIN_DIM3)
    assert graph_emb.shape == (N_ITEMS, PROTEIN_DIM3)
    assert assignment.shape == (N_ITEMS, S_NODES, 2)
    assert pos_penalty.shape == ()

    # numerical check against the pure-JAX reference of the PyTorch forward
    r_out, r_sub, r_gra, r_pen, r_assign = gibgcn_reference(
        params, emb, adj, batch, prot_feature, NUM_GROUPS)
    np.testing.assert_allclose(np.asarray(out), np.asarray(r_out), rtol=5e-3, atol=5e-3)
    np.testing.assert_allclose(np.asarray(sub_emb), np.asarray(r_sub), rtol=5e-3, atol=5e-3)
    np.testing.assert_allclose(np.asarray(graph_emb), np.asarray(r_gra), rtol=5e-3, atol=5e-3)
    np.testing.assert_allclose(np.asarray(assignment), np.asarray(r_assign), rtol=5e-3, atol=5e-3)
    np.testing.assert_allclose(np.asarray(pos_penalty), np.asarray(r_pen), rtol=5e-3, atol=5e-3)

    print("KERNEL_OK")
</pallas_src>

<mosaic_0001>
module attributes {stable_mosaic.version = 11 : i64} {
  func.func @_gib_fused_kernel(%arg0: i32, %arg1: memref<128x64xf32, #tpu.memory_space<vmem>>, %arg2: memref<128x32xf32, #tpu.memory_space<vmem>>, %arg3: memref<128x128xf32, #tpu.memory_space<vmem>>, %arg4: memref<8x128xf32, #tpu.memory_space<vmem>>, %arg5: memref<8x1xi32, #tpu.memory_space<vmem>>, %arg6: memref<1x8xi32, #tpu.memory_space<vmem>>, %arg7: memref<64x32xf32, #tpu.memory_space<vmem>>, %arg8: memref<1x32xf32, #tpu.memory_space<vmem>>, %arg9: memref<32x2xf32, #tpu.memory_space<vmem>>, %arg10: memref<1x2xf32, #tpu.memory_space<vmem>>, %arg11: memref<32x32xf32, #tpu.memory_space<vmem>>, %arg12: memref<1x32xf32, #tpu.memory_space<vmem>>, %arg13: memref<32x32xf32, #tpu.memory_space<vmem>>, %arg14: memref<1x32xf32, #tpu.memory_space<vmem>>, %arg15: memref<8x32xf32, #tpu.memory_space<vmem>>, %arg16: memref<16x32xf32, #tpu.memory_space<vmem>>, %arg17: memref<128x2xf32, #tpu.memory_space<vmem>>, %arg18: memref<1x1xf32, #tpu.memory_space<vmem>>) attributes {dimension_semantics = [#tpu.dimension_semantics<arbitrary>], iteration_bounds = array<i64: 1>, scalar_prefetch = 0 : i64, scratch_operands = 0 : i64, tpu.core_type = #tpu.core_type<tc>, window_params = [{pipeline_mode = #tpu.pipeline_mode<synchronous>, transform_indices = @transform_0, window_bounds = array<i64: 128, 64>}, {pipeline_mode = #tpu.pipeline_mode<synchronous>, transform_indices = @transform_1, window_bounds = array<i64: 128, 32>}, {pipeline_mode = #tpu.pipeline_mode<synchronous>, transform_indices = @transform_2, window_bounds = array<i64: 128, 128>}, {pipeline_mode = #tpu.pipeline_mode<synchronous>, transform_indices = @transform_3, window_bounds = array<i64: 8, 128>}, {pipeline_mode = #tpu.pipeline_mode<synchronous>, transform_indices = @transform_4, window_bounds = array<i64: 8, 1>}, {pipeline_mode = #tpu.pipeline_mode<synchronous>, transform_indices = @transform_5, window_bounds = array<i64: 1, 8>}, {pipeline_mode = #tpu.pipeline_mode<synchronous>, transform_indices = @transform_6, window_bounds = array<i64: 64, 32>}, {pipeline_mode = #tpu.pipeline_mode<synchronous>, transform_indices = @transform_7, window_bounds = array<i64: 1, 32>}, {pipeline_mode = #tpu.pipeline_mode<synchronous>, transform_indices = @transform_8, window_bounds = array<i64: 32, 2>}, {pipeline_mode = #tpu.pipeline_mode<synchronous>, transform_indices = @transform_9, window_bounds = array<i64: 1, 2>}, {pipeline_mode = #tpu.pipeline_mode<synchronous>, transform_indices = @transform_10, window_bounds = array<i64: 32, 32>}, {pipeline_mode = #tpu.pipeline_mode<synchronous>, transform_indices = @transform_11, window_bounds = array<i64: 1, 32>}, {pipeline_mode = #tpu.pipeline_mode<synchronous>, transform_indices = @transform_12, window_bounds = array<i64: 32, 32>}, {pipeline_mode = #tpu.pipeline_mode<synchronous>, transform_indices = @transform_13, window_bounds = array<i64: 1, 32>}, {pipeline_mode = #tpu.pipeline_mode<synchronous>, transform_indices = @transform_14, window_bounds = array<i64: 8, 32>}, {pipeline_mode = #tpu.pipeline_mode<synchronous>, transform_indices = @transform_15, window_bounds = array<i64: 16, 32>}, {pipeline_mode = #tpu.pipeline_mode<synchronous>, transform_indices = @transform_16, window_bounds = array<i64: 128, 2>}, {pipeline_mode = #tpu.pipeline_mode<synchronous>, transform_indices = @transform_17, window_bounds = array<i64: 1, 1>}]} {
    %c0 = arith.constant 0 : index
    %c0_0 = arith.constant 0 : index
    %0 = vector.load %arg1[%c0, %c0_0] : memref<128x64xf32, #tpu.memory_space<vmem>>, vector<128x64xf32>
    %c0_1 = arith.constant 0 : index
    %c0_2 = arith.constant 0 : index
    %1 = vector.load %arg2[%c0_1, %c0_2] : memref<128x32xf32, #tpu.memory_space<vmem>>, vector<128x32xf32>
    %c0_3 = arith.constant 0 : index
    %c0_4 = arith.constant 0 : index
    %2 = vector.load %arg7[%c0_3, %c0_4] : memref<64x32xf32, #tpu.memory_space<vmem>>, vector<64x32xf32>
    %cst = arith.constant dense<0.000000e+00> : vector<128x32xf32>
    %3 = tpu.matmul %0, %2, %cst {dimension_numbers = #tpu.dot_dimension_numbers<[1], [0], [0], [1], [0, 0, 1, 1], [], []>} : vector<128x64xf32>, vector<64x32xf32>, vector<128x32xf32> -> vector<128x32xf32>
    %c0_5 = arith.constant 0 : index
    %c0_6 = arith.constant 0 : index
    %4 = vector.load %arg8[%c0_5, %c0_6] : memref<1x32xf32, #tpu.memory_space<vmem>>, vector<1x32xf32>
    %5 = vector.broadcast %4 : vector<1x32xf32> to vector<128x32xf32>
    %6 = arith.addf %3, %5 : vector<128x32xf32>
    %cst_7 = arith.constant 0.000000e+00 : f32
    %7 = vector.broadcast %cst_7 : f32 to vector<128x32xf32>
    %8 = arith.maximumf %6, %7 : vector<128x32xf32>
    %c0_8 = arith.constant 0 : index
    %c0_9 = arith.constant 0 : index
    %9 = vector.load %arg9[%c0_8, %c0_9] : memref<32x2xf32, #tpu.memory_space<vmem>>, vector<32x2xf32>
    %cst_10 = arith.constant dense<0.000000e+00> : vector<128x2xf32>
    %10 = tpu.matmul %8, %9, %cst_10 {dimension_numbers = #tpu.dot_dimension_numbers<[1], [0], [0], [1], [0, 0, 1, 1], [], []>} : vector<128x32xf32>, vector<32x2xf32>, vector<128x2xf32> -> vector<128x2xf32>
    %c0_11 = arith.constant 0 : index
    %c0_12 = arith.constant 0 : index
    %11 = vector.load %arg10[%c0_11, %c0_12] : memref<1x2xf32, #tpu.memory_space<vmem>>, vector<1x2xf32>
    %12 = vector.broadcast %11 : vector<1x2xf32> to vector<128x2xf32>
    %13 = arith.addf %10, %12 : vector<128x2xf32>
    %14 = vector.extract_strided_slice %13 {offsets = [0, 0], sizes = [128, 1], strides = [1, 1]} : vector<128x2xf32> to vector<128x1xf32>
    %15 = vector.extract_strided_slice %13 {offsets = [0, 1], sizes = [128, 1], strides = [1, 1]} : vector<128x2xf32> to vector<128x1xf32>
    %16 = arith.subf %15, %14 : vector<128x1xf32>
    %17 = math.exp %16 : vector<128x1xf32>
    %cst_13 = arith.constant 1.000000e+00 : f32
    %18 = vector.broadcast %cst_13 : f32 to vector<128x1xf32>
    %19 = arith.addf %18, %17 : vector<128x1xf32>
    %cst_14 = arith.constant 1.000000e+00 : f32
    %20 = vector.broadcast %cst_14 : f32 to vector<128x1xf32>
    %21 = arith.divf %20, %19 : vector<128x1xf32>
    %cst_15 = arith.constant 1.000000e+00 : f32
    %22 = vector.broadcast %cst_15 : f32 to vector<128x1xf32>
    %23 = arith.subf %22, %21 : vector<128x1xf32>
    %24 = tpu.iota {dimensions = array<i32: 1>} : vector<128x2xi32>
    %c0_i32 = arith.constant 0 : i32
    %25 = vector.broadcast %c0_i32 : i32 to vector<128x2xi32>
    %26 = arith.cmpi eq, %24, %25 : vector<128x2xi32>
    %27 = vector.shape_cast %21 : vector<128x1xf32> to vector<128x1xf32>
    %28 = vector.broadcast %27 : vector<128x1xf32> to vector<128x2xf32>
    %29 = vector.shape_cast %23 : vector<128x1xf32> to vector<128x1xf32>
    %30 = vector.broadcast %29 : vector<128x1xf32> to vector<128x2xf32>
    %31 = arith.select %26, %28, %30 : vector<128x2xi1>, vector<128x2xf32>
    %c0_16 = arith.constant 0 : index
    %c0_17 = arith.constant 0 : index
    %32 = vector.load %arg17[%c0_16, %c0_17] : memref<128x2xf32, #tpu.memory_space<vmem>>, vector<128x2xf32>
    tpu.vector_store %arg17[%c0_16, %c0_17], %31 {strides = array<i32>} : memref<128x2xf32, #tpu.memory_space<vmem>>, vector<128x2xf32>,
    %c0_18 = arith.constant 0 : index
    %c0_19 = arith.constant 0 : index
    %33 = vector.load %arg4[%c0_18, %c0_19] : memref<8x128xf32, #tpu.memory_space<vmem>>, vector<8x128xf32>
    %34 = vector.broadcast %21 : vector<128x1xf32> to vector<128x32xf32>
    %35 = arith.mulf %34, %1 : vector<128x32xf32>
    %cst_20 = arith.constant dense<0.000000e+00> : vector<8x32xf32>
    %36 = tpu.matmul %33, %35, %cst_20 {dimension_numbers = #tpu.dot_dimension_numbers<[1], [0], [0], [1], [0, 0, 1, 1], [], []>} : vector<8x128xf32>, vector<128x32xf32>, vector<8x32xf32> -> vector<8x32xf32>
    %cst_21 = arith.constant 6.250000e-02 : f32
    %37 = vector.broadcast %cst_21 : f32 to vector<8x32xf32>
    %38 = arith.mulf %36, %37 : vector<8x32xf32>
    %cst_22 = arith.constant dense<0.000000e+00> : vector<8x32xf32>
    %39 = tpu.matmul %33, %1, %cst_22 {dimension_numbers = #tpu.dot_dimension_numbers<[1], [0], [0], [1], [0, 0, 1, 1], [], []>} : vector<8x128xf32>, vector<128x32xf32>, vector<8x32xf32> -> vector<8x32xf32>
    %cst_23 = arith.constant 6.250000e-02 : f32
    %40 = vector.broadcast %cst_23 : f32 to vector<8x32xf32>
    %41 = arith.mulf %39, %40 : vector<8x32xf32>
    %42 = tpu.concatenate %38, %41 in 0 : vector<8x32xf32>, vector<8x32xf32> -> vector<16x32xf32>
    %c0_24 = arith.constant 0 : index
    %c0_25 = arith.constant 0 : index
    %43 = vector.load %arg16[%c0_24, %c0_25] : memref<16x32xf32, #tpu.memory_space<vmem>>, vector<16x32xf32>
    tpu.vector_store %arg16[%c0_24, %c0_25], %42 {strides = array<i32>} : memref<16x32xf32, #tpu.memory_space<vmem>>, vector<16x32xf32>,
    %c0_26 = arith.constant 0 : index
    %c0_27 = arith.constant 0 : index
    %44 = vector.load %arg3[%c0_26, %c0_27] : memref<128x128xf32, #tpu.memory_space<vmem>>, vector<128x128xf32>
    %cst_28 = arith.constant dense<0.000000e+00> : vector<128x2xf32>
    %45 = tpu.matmul %44, %31, %cst_28 {dimension_numbers = #tpu.dot_dimension_numbers<[1], [0], [0], [1], [0, 0, 1, 1], [], []>} : vector<128x128xf32>, vector<128x2xf32>, vector<128x2xf32> -> vector<128x2xf32>
    %46 = vector.broadcast %21 : vector<128x1xf32> to vector<128x2xf32>
    %47 = arith.mulf %46, %45 : vector<128x2xf32>
    %cst_29 = arith.constant dense<0.000000e+00> : vector<8x2xf32>
    %48 = tpu.matmul %33, %47, %cst_29 {dimension_numbers = #tpu.dot_dimension_numbers<[1], [0], [0], [1], [0, 0, 1, 1], [], []>} : vector<8x128xf32>, vector<128x2xf32>, vector<8x2xf32> -> vector<8x2xf32>
    %49 = vector.broadcast %23 : vector<128x1xf32> to vector<128x2xf32>
    %50 = arith.mulf %49, %45 : vector<128x2xf32>
    %cst_30 = arith.constant dense<0.000000e+00> : vector<8x2xf32>
    %51 = tpu.matmul %33, %50, %cst_30 {dimension_numbers = #tpu.dot_dimension_numbers<[1], [0], [0], [1], [0, 0, 1, 1], [], []>} : vector<8x128xf32>, vector<128x2xf32>, vector<8x2xf32> -> vector<8x2xf32>
    %52 = vector.extract_strided_slice %48 {offsets = [0, 0], sizes = [8, 1], strides = [1, 1]} : vector<8x2xf32> to vector<8x1xf32>
    %53 = vector.extract_strided_slice %48 {offsets = [0, 1], sizes = [8, 1], strides = [1, 1]} : vector<8x2xf32> to vector<8x1xf32>
    %54 = vector.extract_strided_slice %51 {offsets = [0, 0], sizes = [8, 1], strides = [1, 1]} : vector<8x2xf32> to vector<8x1xf32>
    %55 = vector.extract_strided_slice %51 {offsets = [0, 1], sizes = [8, 1], strides = [1, 1]} : vector<8x2xf32> to vector<8x1xf32>
    %56 = math.absf %52 : vector<8x1xf32>
    %57 = math.absf %53 : vector<8x1xf32>
    %58 = arith.addf %56, %57 : vector<8x1xf32>
    %cst_31 = arith.constant 9.99999974E-6 : f32
    %59 = vector.broadcast %cst_31 : f32 to vector<8x1xf32>
    %60 = arith.maximumf %58, %59 : vector<8x1xf32>
    %61 = math.absf %54 : vector<8x1xf32>
    %62 = math.absf %55 : vector<8x1xf32>
    %63 = arith.addf %61, %62 : vector<8x1xf32>
    %cst_32 = arith.constant 9.99999974E-6 : f32
    %64 = vector.broadcast %cst_32 : f32 to vector<8x1xf32>
    %65 = arith.maximumf %63, %64 : vector<8x1xf32>
    %66 = arith.divf %52, %60 : vector<8x1xf32>
    %67 = arith.divf %55, %65 : vector<8x1xf32>
    %cst_33 = arith.constant 1.000000e+00 : f32
    %68 = vector.broadcast %cst_33 : f32 to vector<8x1xf32>
    %69 = arith.subf %66, %68 : vector<8x1xf32>
    %70 = arith.mulf %69, %69 : vector<8x1xf32>
    %cst_34 = arith.constant 1.000000e+00 : f32
    %71 = vector.broadcast %cst_34 : f32 to vector<8x1xf32>
    %72 = arith.subf %67, %71 : vector<8x1xf32>
    %73 = arith.mulf %72, %72 : vector<8x1xf32>
    %74 = arith.addf %70, %73 : vector<8x1xf32>
    %cst_35 = arith.constant 5.000000e-01 : f32
    %75 = vector.broadcast %cst_35 : f32 to vector<8x1xf32>
    %76 = arith.mulf %75, %74 : vector<8x1xf32>
    %c0_36 = arith.constant 0 : index
    %c0_37 = arith.constant 0 : index
    %77 = vector.load %arg5[%c0_36, %c0_37] : memref<8x1xi32, #tpu.memory_space<vmem>>, vector<8x1xi32>
    %c0_38 = arith.constant 0 : index
    %c0_39 = arith.constant 0 : index
    %78 = vector.load %arg6[%c0_38, %c0_39] : memref<1x8xi32, #tpu.memory_space<vmem>>, vector<1x8xi32>
    %79 = vector.broadcast %77 : vector<8x1xi32> to vector<8x8xi32>
    %80 = vector.broadcast %78 : vector<1x8xi32> to vector<8x8xi32>
    %81 = arith.cmpi eq, %79, %80 : vector<8x8xi32>
    %82 = arith.extui %81 : vector<8x8xi1> to vector<8x8xi32>
    %83 = arith.sitofp %82 : vector<8x8xi32> to vector<8x8xf32>
    %cst_40 = arith.constant dense<0.000000e+00> : vector<8xf32>
    %84 = vector.multi_reduction <add>, %83, %cst_40 [1] : vector<8x8xf32> to vector<8xf32>
    %85 = vector.shape_cast %84 : vector<8xf32> to vector<8x1xf32>
    %cst_41 = arith.constant 5.000000e-01 : f32
    %86 = vector.broadcast %cst_41 : f32 to vector<8x1xf32>
    %87 = arith.divf %86, %85 : vector<8x1xf32>
    %88 = arith.mulf %87, %76 : vector<8x1xf32>
    %89 = vector.shape_cast %88 : vector<8x1xf32> to vector<1x8x1xf32>
    %cst_42 = arith.constant dense<0.000000e+00> : vector<1xf32>
    %90 = vector.multi_reduction <add>, %89, %cst_42 [1, 2] : vector<1x8x1xf32> to vector<1xf32>
    %91 = vector.shape_cast %90 : vector<1xf32> to vector<1x1x1xf32>
    %92 = vector.extract %91[0, 0, 0] : f32 from vector<1x1x1xf32>
    %93 = vector.broadcast %92 : f32 to vector<1x1xf32>
    %c0_43 = arith.constant 0 : index
    %c0_44 = arith.constant 0 : index
    %94 = vector.load %arg18[%c0_43, %c0_44] : memref<1x1xf32, #tpu.memory_space<vmem>>, vector<1x1xf32>
    tpu.vector_store %arg18[%c0_43, %c0_44], %93 {strides = array<i32>} : memref<1x1xf32, #tpu.memory_space<vmem>>, vector<1x1xf32>,
    %c0_45 = arith.constant 0 : index
    %c0_46 = arith.constant 0 : index
    %95 = vector.load %arg11[%c0_45, %c0_46] : memref<32x32xf32, #tpu.memory_space<vmem>>, vector<32x32xf32>
    %cst_47 = arith.constant dense<0.000000e+00> : vector<8x32xf32>
    %96 = tpu.matmul %38, %95, %cst_47 {dimension_numbers = #tpu.dot_dimension_numbers<[1], [0], [0], [1], [0, 0, 1, 1], [], []>} : vector<8x32xf32>, vector<32x32xf32>, vector<8x32xf32> -> vector<8x32xf32>
    %c0_48 = arith.constant 0 : index
    %c0_49 = arith.constant 0 : index
    %97 = vector.load %arg12[%c0_48, %c0_49] : memref<1x32xf32, #tpu.memory_space<vmem>>, vector<1x32xf32>
    %98 = vector.broadcast %97 : vector<1x32xf32> to vector<8x32xf32>
    %99 = arith.addf %96, %98 : vector<8x32xf32>
    %cst_50 = arith.constant 0.000000e+00 : f32
    %100 = vector.broadcast %cst_50 : f32 to vector<8x32xf32>
    %101 = arith.maximumf %99, %100 : vector<8x32xf32>
    %c0_51 = arith.constant 0 : index
    %c0_52 = arith.constant 0 : index
    %102 = vector.load %arg13[%c0_51, %c0_52] : memref<32x32xf32, #tpu.memory_space<vmem>>, vector<32x32xf32>
    %cst_53 = arith.constant dense<0.000000e+00> : vector<8x32xf32>
    %103 = tpu.matmul %101, %102, %cst_53 {dimension_numbers = #tpu.dot_dimension_numbers<[1], [0], [0], [1], [0, 0, 1, 1], [], []>} : vector<8x32xf32>, vector<32x32xf32>, vector<8x32xf32> -> vector<8x32xf32>
    %c0_54 = arith.constant 0 : index
    %c0_55 = arith.constant 0 : index
    %104 = vector.load %arg14[%c0_54, %c0_55] : memref<1x32xf32, #tpu.memory_space<vmem>>, vector<1x32xf32>
    %105 = vector.broadcast %104 : vector<1x32xf32> to vector<8x32xf32>
    %106 = arith.addf %103, %105 : vector<8x32xf32>
    %c0_56 = arith.constant 0 : index
    %c0_57 = arith.constant 0 : index
    %107 = vector.load %arg15[%c0_56, %c0_57] : memref<8x32xf32, #tpu.memory_space<vmem>>, vector<8x32xf32>
    tpu.vector_store %arg15[%c0_56, %c0_57], %106 {strides = array<i32>} : memref<8x32xf32, #tpu.memory_space<vmem>>, vector<8x32xf32>,
    return
  }
  func.func @transform_0(%arg0: i32) -> (i32, i32) {
    %c0_i32 = arith.constant 0 : i32
    %c0_i32_0 = arith.constant 0 : i32
    %c0_i32_1 = arith.constant 0 : i32
    return %c0_i32, %c0_i32_0 : i32, i32
  }
  func.func @transform_1(%arg0: i32) -> (i32, i32) {
    %c0_i32 = arith.constant 0 : i32
    %c0_i32_0 = arith.constant 0 : i32
    %c0_i32_1 = arith.constant 0 : i32
    return %c0_i32, %c0_i32_0 : i32, i32
  }
  func.func @transform_2(%arg0: i32) -> (i32, i32) {
    %c0_i32 = arith.constant 0 : i32
    %c0_i32_0 = arith.constant 0 : i32
    %c0_i32_1 = arith.constant 0 : i32
    return %c0_i32, %c0_i32_0 : i32, i32
  }
  func.func @transform_3(%arg0: i32) -> (i32, i32) {
    %c0_i32 = arith.constant 0 : i32
    %c0_i32_0 = arith.constant 0 : i32
    %c0_i32_1 = arith.constant 0 : i32
    return %c0_i32, %c0_i32_0 : i32, i32
  }
  func.func @transform_4(%arg0: i32) -> (i32, i32) {
    %c0_i32 = arith.constant 0 : i32
    %c0_i32_0 = arith.constant 0 : i32
    %c0_i32_1 = arith.constant 0 : i32
    return %c0_i32, %c0_i32_0 : i32, i32
  }
  func.func @transform_5(%arg0: i32) -> (i32, i32) {
    %c0_i32 = arith.constant 0 : i32
    %c0_i32_0 = arith.constant 0 : i32
    %c0_i32_1 = arith.constant 0 : i32
    return %c0_i32, %c0_i32_0 : i32, i32
  }
  func.func @transform_6(%arg0: i32) -> (i32, i32) {
    %c0_i32 = arith.constant 0 : i32
    %c0_i32_0 = arith.constant 0 : i32
    %c0_i32_1 = arith.constant 0 : i32
    return %c0_i32, %c0_i32_0 : i32, i32
  }
  func.func @transform_7(%arg0: i32) -> (i32, i32) {
    %c0_i32 = arith.constant 0 : i32
    %c0_i32_0 = arith.constant 0 : i32
    %c0_i32_1 = arith.constant 0 : i32
    return %c0_i32, %c0_i32_0 : i32, i32
  }
  func.func @transform_8(%arg0: i32) -> (i32, i32) {
    %c0_i32 = arith.constant 0 : i32
    %c0_i32_0 = arith.constant 0 : i32
    %c0_i32_1 = arith.constant 0 : i32
    return %c0_i32, %c0_i32_0 : i32, i32
  }
  func.func @transform_9(%arg0: i32) -> (i32, i32) {
    %c0_i32 = arith.constant 0 : i32
    %c0_i32_0 = arith.constant 0 : i32
    %c0_i32_1 = arith.constant 0 : i32
    return %c0_i32, %c0_i32_0 : i32, i32
  }
  func.func @transform_10(%arg0: i32) -> (i32, i32) {
    %c0_i32 = arith.constant 0 : i32
    %c0_i32_0 = arith.constant 0 : i32
    %c0_i32_1 = arith.constant 0 : i32
    return %c0_i32, %c0_i32_0 : i32, i32
  }
  func.func @transform_11(%arg0: i32) -> (i32, i32) {
    %c0_i32 = arith.constant 0 : i32
    %c0_i32_0 = arith.constant 0 : i32
    %c0_i32_1 = arith.constant 0 : i32
    return %c0_i32, %c0_i32_0 : i32, i32
  }
  func.func @transform_12(%arg0: i32) -> (i32, i32) {
    %c0_i32 = arith.constant 0 : i32
    %c0_i32_0 = arith.constant 0 : i32
    %c0_i32_1 = arith.constant 0 : i32
    return %c0_i32, %c0_i32_0 : i32, i32
  }
  func.func @transform_13(%arg0: i32) -> (i32, i32) {
    %c0_i32 = arith.constant 0 : i32
    %c0_i32_0 = arith.constant 0 : i32
    %c0_i32_1 = arith.constant 0 : i32
    return %c0_i32, %c0_i32_0 : i32, i32
  }
  func.func @transform_14(%arg0: i32) -> (i32, i32) {
    %c0_i32 = arith.constant 0 : i32
    %c0_i32_0 = arith.constant 0 : i32
    %c0_i32_1 = arith.constant 0 : i32
    return %c0_i32, %c0_i32_0 : i32, i32
  }
  func.func @transform_15(%arg0: i32) -> (i32, i32) {
    %c0_i32 = arith.constant 0 : i32
    %c0_i32_0 = arith.constant 0 : i32
    %c0_i32_1 = arith.constant 0 : i32
    return %c0_i32, %c0_i32_0 : i32, i32
  }
  func.func @transform_16(%arg0: i32) -> (i32, i32) {
    %c0_i32 = arith.constant 0 : i32
    %c0_i32_0 = arith.constant 0 : i32
    %c0_i32_1 = arith.constant 0 : i32
    return %c0_i32, %c0_i32_0 : i32, i32
  }
  func.func @transform_17(%arg0: i32) -> (i32, i32) {
    %c0_i32 = arith.constant 0 : i32
    %c0_i32_0 = arith.constant 0 : i32
    %c0_i32_1 = arith.constant 0 : i32
    return %c0_i32, %c0_i32_0 : i32, i32
  }
}

</mosaic_0001>

<llo_original>
// kernel: gibgcn_forward.1
$region0: #{gibgcn_forward.1}
  #allocation0 [shape = 'u32[]', space=smem, size = 0x4, offset = 0x4, fixed_abs, tag = 'smem constant byte address 0x4 - core index']
  #allocation1 [shape = 'u32[144,128]{1,0:T(1,128)}', space=vmem, size = 0x12000, scoped, tag = 'internal scratch']
  %s0 = inlined_call_operand.vmem [shape: f32[128,64], index: 0, kind: input, shape index: {}]
  %s1 = inlined_call_operand.vmem [shape: f32[128,32], index: 1, kind: input, shape index: {}]
  %s2 = inlined_call_operand.vmem [shape: f32[128,128], index: 2, kind: input, shape index: {}]
  %s3 = inlined_call_operand.vmem [shape: f32[8,128], index: 3, kind: input, shape index: {}]
  %s4 = inlined_call_operand.vmem [shape: s32[8,1], index: 4, kind: input, shape index: {}]
  %s5 = inlined_call_operand.vmem [shape: s32[1,8], index: 5, kind: input, shape index: {}]
  %s6 = inlined_call_operand.vmem [shape: f32[64,32], index: 6, kind: input, shape index: {}]
  %s7 = inlined_call_operand.vmem [shape: f32[1,32], index: 7, kind: input, shape index: {}]
  %s8 = inlined_call_operand.vmem [shape: f32[32,2], index: 8, kind: input, shape index: {}]
  %s9 = inlined_call_operand.vmem [shape: f32[1,2], index: 9, kind: input, shape index: {}]
  %s10 = inlined_call_operand.vmem [shape: f32[32,32], index: 10, kind: input, shape index: {}]
  %s11 = inlined_call_operand.vmem [shape: f32[1,32], index: 11, kind: input, shape index: {}]
  %s12 = inlined_call_operand.vmem [shape: f32[32,32], index: 12, kind: input, shape index: {}]
  %s13 = inlined_call_operand.vmem [shape: f32[1,32], index: 13, kind: input, shape index: {}]
  %s14 = inlined_call_operand.hbm [shape: f32[8,32], index: 14, kind: output, shape index: {0}]
  %s15 = inlined_call_operand.vmem [shape: f32[16,32], index: 15, kind: output, shape index: {1}]
  %s16 = inlined_call_operand.vmem [shape: f32[128,2], index: 16, kind: output, shape index: {2}]
  %s17 = inlined_call_operand.hbm [shape: f32[1,1], index: 17, kind: output, shape index: {3}]
  %18 = xla_tuple %s14, %s15, %s16, %s17
  %s19 = sld [smem:[#allocation0]]
  $region90: #{gibgcn_forward.1} parent=0
    _
  %s21 = ssub.s32 1, %s19
  %s22 = scalar_select 0, %s21, %s19
  $region1: #{gibgcn_forward.1} parent=0
    #allocation2 [shape = 'u8[4096]{0}', space=vmem, size = 0x1000, scoped, tag = 'output window, operand 0, single buffered']
    #allocation3 [shape = 's32[1]{0}', space=sflag, size = 0x4, scoped, tag = 'scoped memory for gibgcn_forward.1']
    #allocation4 [shape = 'u8[512]{0}', space=vmem, size = 0x400, scoped, tag = 'output window, operand 3, single buffered']
    #allocation5 [shape = 's32[1]{0}', space=sflag, size = 0x4, scoped, tag = 'scoped memory for gibgcn_forward.1']
    %23 = vsyncpa [#allocation3], 0
    %24 = vsyncpa [#allocation5], 0
    // Predicated region
    $region2: #{gibgcn_forward.1} parent=1 // pred_check
      _
    $region3: #{gibgcn_forward.1} parent=1 // pred_check_branch
      %26 = sbr.rel (0) target = $region5
    $region4: #{gibgcn_forward.1} parent=1 // pred_region
      _
    $region5: #{gibgcn_forward.1} parent=1 // pred_fallthru
      _
    // Predicated region
    $region6: #{gibgcn_forward.1} parent=1 // pred_check
      _
    $region7: #{gibgcn_forward.1} parent=1 // pred_check_branch
      %28 = sbr.rel (0) target = $region9
    $region8: #{gibgcn_forward.1} parent=1 // pred_region
      _
    $region9: #{gibgcn_forward.1} parent=1 // pred_fallthru
      _
    // Predicated region
    $region10: #{gibgcn_forward.1} parent=1 // pred_check
      _
    $region11: #{gibgcn_forward.1} parent=1 // pred_check_branch
      %30 = sbr.rel (0) target = $region13
    $region12: #{gibgcn_forward.1} parent=1 // pred_region
      _
    $region13: #{gibgcn_forward.1} parent=1 // pred_fallthru
      _
    // Predicated region
    $region14: #{gibgcn_forward.1} parent=1 // pred_check
      _
    $region15: #{gibgcn_forward.1} parent=1 // pred_check_branch
      %32 = sbr.rel (0) target = $region17
    $region16: #{gibgcn_forward.1} parent=1 // pred_region
      _
    $region17: #{gibgcn_forward.1} parent=1 // pred_fallthru
      _
    // Predicated region
    $region18: #{gibgcn_forward.1} parent=1 // pred_check
      _
    $region19: #{gibgcn_forward.1} parent=1 // pred_check_branch
      %34 = sbr.rel (0) target = $region21
    $region20: #{gibgcn_forward.1} parent=1 // pred_region
      _
    $region21: #{gibgcn_forward.1} parent=1 // pred_fallthru
      _
    // Predicated region
    $region22: #{gibgcn_forward.1} parent=1 // pred_check
      _
    $region23: #{gibgcn_forward.1} parent=1 // pred_check_branch
      %36 = sbr.rel (0) target = $region25
    $region24: #{gibgcn_forward.1} parent=1 // pred_region
      _
    $region25: #{gibgcn_forward.1} parent=1 // pred_fallthru
      _
    // Predicated region
    $region26: #{gibgcn_forward.1} parent=1 // pred_check
      _
    $region27: #{gibgcn_forward.1} parent=1 // pred_check_branch
      %38 = sbr.rel (0) target = $region29
    $region28: #{gibgcn_forward.1} parent=1 // pred_region
      _
    $region29: #{gibgcn_forward.1} parent=1 // pred_fallthru
      _
    // Predicated region
    $region30: #{gibgcn_forward.1} parent=1 // pred_check
      _
    $region31: #{gibgcn_forward.1} parent=1 // pred_check_branch
      %40 = sbr.rel (0) target = $region33
    $region32: #{gibgcn_forward.1} parent=1 // pred_region
      _
    $region33: #{gibgcn_forward.1} parent=1 // pred_fallthru
      _
    // Predicated region
    $region34: #{gibgcn_forward.1} parent=1 // pred_check
      _
    $region35: #{gibgcn_forward.1} parent=1 // pred_check_branch
      %42 = sbr.rel (0) target = $region37
    $region36: #{gibgcn_forward.1} parent=1 // pred_region
      _
    $region37: #{gibgcn_forward.1} parent=1 // pred_fallthru
      _
    // Predicated region
    $region38: #{gibgcn_forward.1} parent=1 // pred_check
      _
    $region39: #{gibgcn_forward.1} parent=1 // pred_check_branch
      %44 = sbr.rel (0) target = $region41
    $region40: #{gibgcn_forward.1} parent=1 // pred_region
      _
    $region41: #{gibgcn_forward.1} parent=1 // pred_fallthru
      _
    // Predicated region
    $region42: #{gibgcn_forward.1} parent=1 // pred_check
      _
    $region43: #{gibgcn_forward.1} parent=1 // pred_check_branch
      %46 = sbr.rel (0) target = $region45
    $region44: #{gibgcn_forward.1} parent=1 // pred_region
      _
    $region45: #{gibgcn_forward.1} parent=1 // pred_fallthru
      _
    // Predicated region
    $region46: #{gibgcn_forward.1} parent=1 // pred_check
      _
    $region47: #{gibgcn_forward.1} parent=1 // pred_check_branch
      %48 = sbr.rel (0) target = $region49
    $region48: #{gibgcn_forward.1} parent=1 // pred_region
      _
    $region49: #{gibgcn_forward.1} parent=1 // pred_fallthru
      _
    // Predicated region
    $region50: #{gibgcn_forward.1} parent=1 // pred_check
      _
    $region51: #{gibgcn_forward.1} parent=1 // pred_check_branch
      %50 = sbr.rel (0) target = $region53
    $region52: #{gibgcn_forward.1} parent=1 // pred_region
      _
    $region53: #{gibgcn_forward.1} parent=1 // pred_fallthru
      _
    // Predicated region
    $region54: #{gibgcn_forward.1} parent=1 // pred_check
      _
    $region55: #{gibgcn_forward.1} parent=1 // pred_check_branch
      %52 = sbr.rel (0) target = $region57
    $region56: #{gibgcn_forward.1} parent=1 // pred_region
      _
    $region57: #{gibgcn_forward.1} parent=1 // pred_fallthru
      _
    %v53 = vld [vmem:[%s0] sm:$0xff]
    %v54 = vld [vmem:[%s0 + $0x8] sm:$0xff]
    %v55 = vld [vmem:[%s0 + $0x10] sm:$0xff]
    %v56 = vld [vmem:[%s0 + $0x18] sm:$0xff]
    %v57 = vld [vmem:[%s0 + $0x20] sm:$0xff]
    %v58 = vld [vmem:[%s0 + $0x28] sm:$0xff]
    %v59 = vld [vmem:[%s0 + $0x30] sm:$0xff]
    %v60 = vld [vmem:[%s0 + $0x38] sm:$0xff]
    %v61 = vld [vmem:[%s0 + $0x40] sm:$0xff]
    %v62 = vld [vmem:[%s0 + $0x48] sm:$0xff]
    %v63 = vld [vmem:[%s0 + $0x50] sm:$0xff]
    %v64 = vld [vmem:[%s0 + $0x58] sm:$0xff]
    %v65 = vld [vmem:[%s0 + $0x60] sm:$0xff]
    %v66 = vld [vmem:[%s0 + $0x68] sm:$0xff]
    %v67 = vld [vmem:[%s0 + $0x70] sm:$0xff]
    %v68 = vld [vmem:[%s0 + $0x78] sm:$0xff]
    %v69 = vld [vmem:[%s1] sm:$0xff]
    %v70 = vld [vmem:[%s1 + $0x8] sm:$0xff]
    %v71 = vld [vmem:[%s1 + $0x10] sm:$0xff]
    %v72 = vld [vmem:[%s1 + $0x18] sm:$0xff]
    %v73 = vld [vmem:[%s1 + $0x20] sm:$0xff]
    %v74 = vld [vmem:[%s1 + $0x28] sm:$0xff]
    %v75 = vld [vmem:[%s1 + $0x30] sm:$0xff]
    %v76 = vld [vmem:[%s1 + $0x38] sm:$0xff]
    %v77 = vld [vmem:[%s1 + $0x40] sm:$0xff]
    %v78 = vld [vmem:[%s1 + $0x48] sm:$0xff]
    %v79 = vld [vmem:[%s1 + $0x50] sm:$0xff]
    %v80 = vld [vmem:[%s1 + $0x58] sm:$0xff]
    %v81 = vld [vmem:[%s1 + $0x60] sm:$0xff]
    %v82 = vld [vmem:[%s1 + $0x68] sm:$0xff]
    %v83 = vld [vmem:[%s1 + $0x70] sm:$0xff]
    %v84 = vld [vmem:[%s1 + $0x78] sm:$0xff]
    %v85 = vld [vmem:[%s6] sm:$0xff]
    %v86 = vld [vmem:[%s6 + $0x8] sm:$0xff]
    %v87 = vld [vmem:[%s6 + $0x10] sm:$0xff]
    %v88 = vld [vmem:[%s6 + $0x18] sm:$0xff]
    %v89 = vld [vmem:[%s6 + $0x20] sm:$0xff]
    %v90 = vld [vmem:[%s6 + $0x28] sm:$0xff]
    %v91 = vld [vmem:[%s6 + $0x30] sm:$0xff]
    %v92 = vld [vmem:[%s6 + $0x38] sm:$0xff]
    %v93 = vld [vmem:[%s7] sm:$0x1]
    %v95 = vlaneseq
    %v96 = vshrl.u32 %v95, 7
    %v97 = vsub.s32 0, %v96
    %v98 = vrot.slane %v93, %v97
    %vm100 = vcmask 523264
    %v102 = vsel %vm100, %v53, 0
    %v105 = vsel %vm100, %v54, 0
    %v108 = vsel %vm100, %v55, 0
    %v111 = vsel %vm100, %v56, 0
    %v114 = vsel %vm100, %v57, 0
    %v117 = vsel %vm100, %v58, 0
    %v120 = vsel %vm100, %v59, 0
    %v123 = vsel %vm100, %v60, 0
    %v126 = vsel %vm100, %v61, 0
    %v129 = vsel %vm100, %v62, 0
    %v132 = vsel %vm100, %v63, 0
    %v135 = vsel %vm100, %v64, 0
    %v138 = vsel %vm100, %v65, 0
    %v141 = vsel %vm100, %v66, 0
    %v144 = vsel %vm100, %v67, 0
    %v147 = vsel %vm100, %v68, 0
    %149 = vmatprep.subr.mxu0 0.0
    %150 = vmatpush1.msra.mxu0 %v85
    %151 = vmatprep.subr.mxu0 0.0
    %152 = vmatpush1.msra.mxu0 %v86
    %153 = vmatprep.subr.mxu0 0.0
    %154 = vmatpush1.msra.mxu0 %v87
    %155 = vmatprep.subr.mxu0 0.0
    %156 = vmatpush1.msra.mxu0 %v88
    %157 = vmatprep.subr.mxu0 0.0
    %158 = vmatpush1.msra.mxu0 %v89
    %159 = vmatprep.subr.mxu0 0.0
    %160 = vmatpush1.msra.mxu0 %v90
    %161 = vmatprep.subr.mxu0 0.0
    %162 = vmatpush1.msra.mxu0 %v91
    %163 = vmatprep.subr.mxu0 0.0
    %164 = vmatpush1.msra.mxu0 %v92
    %165 = vmatprep.subr.mxu0 0.0
    %166 = vmatpush1.msra.mxu0 0.0
    %167 = vmatprep.subr.mxu0 0.0
    %168 = vmatpush1.msra.mxu0 0.0
    %169 = vmatprep.subr.mxu0 0.0
    %170 = vmatpush1.msra.mxu0 0.0
    %171 = vmatprep.subr.mxu0 0.0
    %172 = vmatpush1.msra.mxu0 0.0
    %173 = vmatprep.subr.mxu0 0.0
    %174 = vmatpush1.msra.mxu0 0.0
    %175 = vmatprep.subr.mxu0 0.0
    %176 = vmatpush1.msra.mxu0 0.0
    %177 = vmatprep.subr.mxu0 0.0
    %178 = vmatpush1.msra.mxu0 0.0
    %179 = vmatprep.subr.mxu0 0.0
    %180 = vmatpush1.msra.mxu0 0.0
    %181 = vmatprep.subr.mxu0 0.0
    %182 = vmatpush1.msra.mxu0 0.0
    %183 = vmatprep.subr.mxu0 0.0
    %184 = vmatpush1.msra.mxu0 0.0
    %185 = vmatprep.subr.mxu0 0.0
    %186 = vmatpush1.msra.mxu0 0.0
    %187 = vmatprep.subr.mxu0 0.0
    %188 = vmatpush1.msra.mxu0 0.0
    %189 = vmatprep.subr.mxu0 0.0
    %190 = vmatpush1.msra.mxu0 0.0
    %191 = vmatprep.subr.mxu0 0.0
    %192 = vmatpush1.msra.mxu0 0.0
    %193 = vmatprep.subr.mxu0 0.0
    %194 = vmatpush1.msra.mxu0 0.0
    %195 = vmatprep.subr.mxu0 0.0
    %196 = vmatpush1.msra.mxu0 0.0
    %197 = vmatprep.subr.mxu0 0.0
    %198 = vmatpush1.msra.mxu0 0.0
    %199 = vmatprep.subr.mxu0 0.0
    %200 = vmatpush1.msra.mxu0 0.0
    %201 = vmatprep.subr.mxu0 0.0
    %202 = vmatpush1.msra.mxu0 0.0
    %203 = vmatprep.subr.mxu0 0.0
    %204 = vmatpush1.msra.mxu0 0.0
    %205 = vmatprep.subr.mxu0 0.0
    %206 = vmatpush1.msra.mxu0 0.0
    %207 = vmatprep.subr.mxu0 0.0
    %208 = vmatpush1.msra.mxu0 0.0
    %209 = vmatprep.subr.mxu0 0.0
    %210 = vmatpush1.msra.mxu0 0.0
    %211 = vmatprep.subr.mxu0 0.0
    %212 = vmatpush1.msra.mxu0 0.0
    %213 = vmatprep.mubr.f32.mxu0 0.0
    %214 = vmatmul.mubr.f32.gmra.mrb[0].mxu0 %v102
    %v215 = vpop.f32.mrb[0].mxu0
    %v216 = vadd.f32 %v98, %v215
    %v217 = vpop.f32.mrb[0].mxu0
    %218 = vmatprep.mubr.f32.mxu0 0.0
    %219 = vmatmul.mubr.f32.gmra.mrb[0].mxu0 %v105
    %v220 = vpop.f32.mrb[0].mxu0
    %v221 = vadd.f32 %v98, %v220
    %v222 = vpop.f32.mrb[0].mxu0
    %223 = vmatprep.mubr.f32.mxu0 0.0
    %224 = vmatmul.mubr.f32.gmra.mrb[0].mxu0 %v108
    %v225 = vpop.f32.mrb[0].mxu0
    %v226 = vadd.f32 %v98, %v225
    %v227 = vpop.f32.mrb[0].mxu0
    %228 = vmatprep.mubr.f32.mxu0 0.0
    %229 = vmatmul.mubr.f32.gmra.mrb[0].mxu0 %v111
    %v230 = vpop.f32.mrb[0].mxu0
    %v231 = vadd.f32 %v98, %v230
    %v232 = vpop.f32.mrb[0].mxu0
    %233 = vmatprep.mubr.f32.mxu0 0.0
    %234 = vmatmul.mubr.f32.gmra.mrb[0].mxu0 %v114
    %v235 = vpop.f32.mrb[0].mxu0
    %v236 = vadd.f32 %v98, %v235
    %v237 = vpop.f32.mrb[0].mxu0
    %238 = vmatprep.mubr.f32.mxu0 0.0
    %239 = vmatmul.mubr.f32.gmra.mrb[0].mxu0 %v117
    %v240 = vpop.f32.mrb[0].mxu0
    %v241 = vadd.f32 %v98, %v240
    %v242 = vpop.f32.mrb[0].mxu0
    %243 = vmatprep.mubr.f32.mxu0 0.0
    %244 = vmatmul.mubr.f32.gmra.mrb[0].mxu0 %v120
    %v245 = vpop.f32.mrb[0].mxu0
    %v246 = vadd.f32 %v98, %v245
    %v247 = vpop.f32.mrb[0].mxu0
    %248 = vmatprep.mubr.f32.mxu0 0.0
    %249 = vmatmul.mubr.f32.gmra.mrb[0].mxu0 %v123
    %v250 = vpop.f32.mrb[0].mxu0
    %v251 = vadd.f32 %v98, %v250
    %v252 = vpop.f32.mrb[0].mxu0
    %253 = vmatprep.mubr.f32.mxu0 0.0
    %254 = vmatmul.mubr.f32.gmra.mrb[0].mxu0 %v126
    %v255 = vpop.f32.mrb[0].mxu0
    %v256 = vadd.f32 %v98, %v255
    %v257 = vpop.f32.mrb[0].mxu0
    %258 = vmatprep.mubr.f32.mxu0 0.0
    %259 = vmatmul.mubr.f32.gmra.mrb[0].mxu0 %v129
    %v260 = vpop.f32.mrb[0].mxu0
    %v261 = vadd.f32 %v98, %v260
    %v262 = vpop.f32.mrb[0].mxu0
    %263 = vmatprep.mubr.f32.mxu0 0.0
    %264 = vmatmul.mubr.f32.gmra.mrb[0].mxu0 %v132
    %v265 = vpop.f32.mrb[0].mxu0
    %v266 = vadd.f32 %v98, %v265
    %v267 = vpop.f32.mrb[0].mxu0
    %268 = vmatprep.mubr.f32.mxu0 0.0
    %269 = vmatmul.mubr.f32.gmra.mrb[0].mxu0 %v135
    %v270 = vpop.f32.mrb[0].mxu0
    %v271 = vadd.f32 %v98, %v270
    %v272 = vpop.f32.mrb[0].mxu0
    %273 = vmatprep.mubr.f32.mxu0 0.0
    %274 = vmatmul.mubr.f32.gmra.mrb[0].mxu0 %v138
    %v275 = vpop.f32.mrb[0].mxu0
    %v276 = vadd.f32 %v98, %v275
    %v277 = vpop.f32.mrb[0].mxu0
    %278 = vmatprep.mubr.f32.mxu0 0.0
    %279 = vmatmul.mubr.f32.gmra.mrb[0].mxu0 %v141
    %v280 = vpop.f32.mrb[0].mxu0
    %v281 = vadd.f32 %v98, %v280
    %v282 = vpop.f32.mrb[0].mxu0
    %283 = vmatprep.mubr.f32.mxu0 0.0
    %284 = vmatmul.mubr.f32.gmra.mrb[0].mxu0 %v144
    %v285 = vpop.f32.mrb[0].mxu0
    %v286 = vadd.f32 %v98, %v285
    %v287 = vpop.f32.mrb[0].mxu0
    %288 = vmatprep.mubr.f32.mxu0 0.0
    %289 = vmatmul.mubr.f32.gmra.mrb[0].mxu0 %v147
    %v290 = vpop.f32.mrb[0].mxu0
    %v291 = vadd.f32 %v98, %v290
    %v292 = vpop.f32.mrb[0].mxu0
    %293 = vdwg.mxu0
    %v294 = vmax.f32 %v216, 0.0
    %v295 = vmax.f32 %v221, 0.0
    %v296 = vmax.f32 %v226, 0.0
    %v297 = vmax.f32 %v231, 0.0
    %v298 = vmax.f32 %v236, 0.0
    %v299 = vmax.f32 %v241, 0.0
    %v300 = vmax.f32 %v246, 0.0
    %v301 = vmax.f32 %v251, 0.0
    %v302 = vmax.f32 %v256, 0.0
    %v303 = vmax.f32 %v261, 0.0
    %v304 = vmax.f32 %v266, 0.0
    %v305 = vmax.f32 %v271, 0.0
    %v306 = vmax.f32 %v276, 0.0
    %v307 = vmax.f32 %v281, 0.0
    %v308 = vmax.f32 %v286, 0.0
    %v309 = vmax.f32 %v291, 0.0
    %v310 = vld [vmem:[%s8] sm:$0xff]
    %v311 = vld [vmem:[%s8 + $0x8] sm:$0xff]
    %v312 = vld [vmem:[%s8 + $0x10] sm:$0xff]
    %v313 = vld [vmem:[%s8 + $0x18] sm:$0xff]
    %v314 = vld [vmem:[%s9] sm:$0x1]
    %v316 = vlaneseq
    %v317 = vshrl.u32 %v316, 7
    %v318 = vsub.s32 0, %v317
    %v319 = vrot.slane %v314, %v318
    %vm321 = vcmask 261120
    %v323 = vsel %vm321, %v294, 0
    %v326 = vsel %vm321, %v295, 0
    %v329 = vsel %vm321, %v296, 0
    %v332 = vsel %vm321, %v297, 0
    %v335 = vsel %vm321, %v298, 0
    %v338 = vsel %vm321, %v299, 0
    %v341 = vsel %vm321, %v300, 0
    %v344 = vsel %vm321, %v301, 0
    %v347 = vsel %vm321, %v302, 0
    %v350 = vsel %vm321, %v303, 0
    %v353 = vsel %vm321, %v304, 0
    %v356 = vsel %vm321, %v305, 0
    %v359 = vsel %vm321, %v306, 0
    %v362 = vsel %vm321, %v307, 0
    %v365 = vsel %vm321, %v308, 0
    %v368 = vsel %vm321, %v309, 0
    %370 = vmatprep.subr.mxu0 0.0
    %371 = vmatpush1.msra.mxu0 %v310
    %372 = vmatprep.subr.mxu0 0.0
    %373 = vmatpush1.msra.mxu0 %v311
    %374 = vmatprep.subr.mxu0 0.0
    %375 = vmatpush1.msra.mxu0 %v312
    %376 = vmatprep.subr.mxu0 0.0
    %377 = vmatpush1.msra.mxu0 %v313
    %378 = vmatprep.subr.mxu0 0.0
    %379 = vmatpush1.msra.mxu0 0.0
    %380 = vmatprep.subr.mxu0 0.0
    %381 = vmatpush1.msra.mxu0 0.0
    %382 = vmatprep.subr.mxu0 0.0
    %383 = vmatpush1.msra.mxu0 0.0
    %384 = vmatprep.subr.mxu0 0.0
    %385 = vmatpush1.msra.mxu0 0.0
    %386 = vmatprep.subr.mxu0 0.0
    %387 = vmatpush1.msra.mxu0 0.0
    %388 = vmatprep.subr.mxu0 0.0
    %389 = vmatpush1.msra.mxu0 0.0
    %390 = vmatprep.subr.mxu0 0.0
    %391 = vmatpush1.msra.mxu0 0.0
    %392 = vmatprep.subr.mxu0 0.0
    %393 = vmatpush1.msra.mxu0 0.0
    %394 = vmatprep.subr.mxu0 0.0
    %395 = vmatpush1.msra.mxu0 0.0
    %396 = vmatprep.subr.mxu0 0.0
    %397 = vmatpush1.msra.mxu0 0.0
    %398 = vmatprep.subr.mxu0 0.0
    %399 = vmatpush1.msra.mxu0 0.0
    %400 = vmatprep.subr.mxu0 0.0
    %401 = vmatpush1.msra.mxu0 0.0
    %402 = vmatprep.subr.mxu0 0.0
    %403 = vmatpush1.msra.mxu0 0.0
    %404 = vmatprep.subr.mxu0 0.0
    %405 = vmatpush1.msra.mxu0 0.0
    %406 = vmatprep.subr.mxu0 0.0
    %407 = vmatpush1.msra.mxu0 0.0
    %408 = vmatprep.subr.mxu0 0.0
    %409 = vmatpush1.msra.mxu0 0.0
    %410 = vmatprep.subr.mxu0 0.0
    %411 = vmatpush1.msra.mxu0 0.0
    %412 = vmatprep.subr.mxu0 0.0
    %413 = vmatpush1.msra.mxu0 0.0
    %414 = vmatprep.subr.mxu0 0.0
    %415 = vmatpush1.msra.mxu0 0.0
    %416 = vmatprep.subr.mxu0 0.0
    %417 = vmatpush1.msra.mxu0 0.0
    %418 = vmatprep.subr.mxu0 0.0
    %419 = vmatpush1.msra.mxu0 0.0
    %420 = vmatprep.subr.mxu0 0.0
    %421 = vmatpush1.msra.mxu0 0.0
    %422 = vmatprep.subr.mxu0 0.0
    %423 = vmatpush1.msra.mxu0 0.0
    %424 = vmatprep.subr.mxu0 0.0
    %425 = vmatpush1.msra.mxu0 0.0
    %426 = vmatprep.subr.mxu0 0.0
    %427 = vmatpush1.msra.mxu0 0.0
    %428 = vmatprep.subr.mxu0 0.0
    %429 = vmatpush1.msra.mxu0 0.0
    %430 = vmatprep.subr.mxu0 0.0
    %431 = vmatpush1.msra.mxu0 0.0
    %432 = vmatprep.subr.mxu0 0.0
    %433 = vmatpush1.msra.mxu0 0.0
    %434 = vmatprep.mubr.f32.mxu0 0.0
    %435 = vmatmul.mubr.f32.gmra.mrb[0].mxu0 %v323
    %v436 = vpop.f32.mrb[0].mxu0
    %v437 = vadd.f32 %v319, %v436
    %v438 = vpop.f32.mrb[0].mxu0
    %439 = vmatprep.mubr.f32.mxu0 0.0
    %440 = vmatmul.mubr.f32.gmra.mrb[0].mxu0 %v326
    %v441 = vpop.f32.mrb[0].mxu0
    %v442 = vadd.f32 %v319, %v441
    %v443 = vpop.f32.mrb[0].mxu0
    %444 = vmatprep.mubr.f32.mxu0 0.0
    %445 = vmatmul.mubr.f32.gmra.mrb[0].mxu0 %v329
    %v446 = vpop.f32.mrb[0].mxu0
    %v447 = vadd.f32 %v319, %v446
    %v448 = vpop.f32.mrb[0].mxu0
    %449 = vmatprep.mubr.f32.mxu0 0.0
    %450 = vmatmul.mubr.f32.gmra.mrb[0].mxu0 %v332
    %v451 = vpop.f32.mrb[0].mxu0
    %v452 = vadd.f32 %v319, %v451
    %v453 = vpop.f32.mrb[0].mxu0
    %454 = vmatprep.mubr.f32.mxu0 0.0
    %455 = vmatmul.mubr.f32.gmra.mrb[0].mxu0 %v335
    %v456 = vpop.f32.mrb[0].mxu0
    %v457 = vadd.f32 %v319, %v456
    %v458 = vpop.f32.mrb[0].mxu0
    %459 = vmatprep.mubr.f32.mxu0 0.0
    %460 = vmatmul.mubr.f32.gmra.mrb[0].mxu0 %v338
    %v461 = vpop.f32.mrb[0].mxu0
    %v462 = vadd.f32 %v319, %v461
    %v463 = vpop.f32.mrb[0].mxu0
    %464 = vmatprep.mubr.f32.mxu0 0.0
    %465 = vmatmul.mubr.f32.gmra.mrb[0].mxu0 %v341
    %v466 = vpop.f32.mrb[0].mxu0
    %v467 = vadd.f32 %v319, %v466
    %v468 = vpop.f32.mrb[0].mxu0
    %469 = vmatprep.mubr.f32.mxu0 0.0
    %470 = vmatmul.mubr.f32.gmra.mrb[0].mxu0 %v344
    %v471 = vpop.f32.mrb[0].mxu0
    %v472 = vadd.f32 %v319, %v471
    %v473 = vpop.f32.mrb[0].mxu0
    %474 = vmatprep.mubr.f32.mxu0 0.0
    %475 = vmatmul.mubr.f32.gmra.mrb[0].mxu0 %v347
    %v476 = vpop.f32.mrb[0].mxu0
    %v477 = vadd.f32 %v319, %v476
    %v478 = vpop.f32.mrb[0].mxu0
    %479 = vmatprep.mubr.f32.mxu0 0.0
    %480 = vmatmul.mubr.f32.gmra.mrb[0].mxu0 %v350
    %v481 = vpop.f32.mrb[0].mxu0
    %v482 = vadd.f32 %v319, %v481
    %v483 = vpop.f32.mrb[0].mxu0
    %484 = vmatprep.mubr.f32.mxu0 0.0
    %485 = vmatmul.mubr.f32.gmra.mrb[0].mxu0 %v353
    %v486 = vpop.f32.mrb[0].mxu0
    %v487 = vadd.f32 %v319, %v486
    %v488 = vpop.f32.mrb[0].mxu0
    %489 = vmatprep.mubr.f32.mxu0 0.0
    %490 = vmatmul.mubr.f32.gmra.mrb[0].mxu0 %v356
    %v491 = vpop.f32.mrb[0].mxu0
    %v492 = vadd.f32 %v319, %v491
    %v493 = vpop.f32.mrb[0].mxu0
    %494 = vmatprep.mubr.f32.mxu0 0.0
    %495 = vmatmul.mubr.f32.gmra.mrb[0].mxu0 %v359
    %v496 = vpop.f32.mrb[0].mxu0
    %v497 = vadd.f32 %v319, %v496
    %v498 = vpop.f32.mrb[0].mxu0
    %499 = vmatprep.mubr.f32.mxu0 0.0
    %500 = vmatmul.mubr.f32.gmra.mrb[0].mxu0 %v362
    %v501 = vpop.f32.mrb[0].mxu0
    %v502 = vadd.f32 %v319, %v501
    %v503 = vpop.f32.mrb[0].mxu0
    %504 = vmatprep.mubr.f32.mxu0 0.0
    %505 = vmatmul.mubr.f32.gmra.mrb[0].mxu0 %v365
    %v506 = vpop.f32.mrb[0].mxu0
    %v507 = vadd.f32 %v319, %v506
    %v508 = vpop.f32.mrb[0].mxu0
    %509 = vmatprep.mubr.f32.mxu0 0.0
    %510 = vmatmul.mubr.f32.gmra.mrb[0].mxu0 %v368
    %v511 = vpop.f32.mrb[0].mxu0
    %v512 = vadd.f32 %v319, %v511
    %v513 = vpop.f32.mrb[0].mxu0
    %514 = vdwg.mxu0
    %531 = vrot.lane.b32.xlu0 %v437, 1
    %v532 = vpop.permute.xlu0 %531
    %533 = vrot.lane.b32.xlu0 %v442, 1
    %v534 = vpop.permute.xlu0 %533
    %535 = vrot.lane.b32.xlu0 %v447, 1
    %v536 = vpop.permute.xlu0 %535
    %537 = vrot.lane.b32.xlu0 %v452, 1
    %v538 = vpop.permute.xlu0 %537
    %539 = vrot.lane.b32.xlu0 %v457, 1
    %v540 = vpop.permute.xlu0 %539
    %541 = vrot.lane.b32.xlu0 %v462, 1
    %v542 = vpop.permute.xlu0 %541
    %543 = vrot.lane.b32.xlu0 %v467, 1
    %v544 = vpop.permute.xlu0 %543
    %545 = vrot.lane.b32.xlu0 %v472, 1
    %v546 = vpop.permute.xlu0 %545
    %547 = vrot.lane.b32.xlu0 %v477, 1
    %v548 = vpop.permute.xlu0 %547
    %549 = vrot.lane.b32.xlu0 %v482, 1
    %v550 = vpop.permute.xlu0 %549
    %551 = vrot.lane.b32.xlu0 %v487, 1
    %v552 = vpop.permute.xlu0 %551
    %553 = vrot.lane.b32.xlu0 %v492, 1
    %v554 = vpop.permute.xlu0 %553
    %555 = vrot.lane.b32.xlu0 %v497, 1
    %v556 = vpop.permute.xlu0 %555
    %557 = vrot.lane.b32.xlu0 %v502, 1
    %v558 = vpop.permute.xlu0 %557
    %559 = vrot.lane.b32.xlu0 %v507, 1
    %v560 = vpop.permute.xlu0 %559
    %561 = vrot.lane.b32.xlu0 %v512, 1
    %v562 = vpop.permute.xlu0 %561
    %v579 = vsub.f32 %v437, %v532
    %v580 = vsub.f32 %v442, %v534
    %v581 = vsub.f32 %v447, %v536
    %v582 = vsub.f32 %v452, %v538
    %v583 = vsub.f32 %v457, %v540
    %v584 = vsub.f32 %v462, %v542
    %v585 = vsub.f32 %v467, %v544
    %v586 = vsub.f32 %v472, %v546
    %v587 = vsub.f32 %v477, %v548
    %v588 = vsub.f32 %v482, %v550
    %v589 = vsub.f32 %v487, %v552
    %v590 = vsub.f32 %v492, %v554
    %v591 = vsub.f32 %v497, %v556
    %v592 = vsub.f32 %v502, %v558
    %v593 = vsub.f32 %v507, %v560
    %v594 = vsub.f32 %v512, %v562
    %v595 = vmul.f32 %v579, 1.442695
    %v596 = vpow.pop %v595
    %v597 = vmul.f32 %v580, 1.442695
    %v598 = vpow.pop %v597
    %v599 = vmul.f32 %v581, 1.442695
    %v600 = vpow.pop %v599
    %v601 = vmul.f32 %v582, 1.442695
    %v602 = vpow.pop %v601
    %v603 = vmul.f32 %v583, 1.442695
    %v604 = vpow.pop %v603
    %v605 = vmul.f32 %v584, 1.442695
    %v606 = vpow.pop %v605
    %v607 = vmul.f32 %v585, 1.442695
    %v608 = vpow.pop %v607
    %v609 = vmul.f32 %v586, 1.442695
    %v610 = vpow.pop %v609
    %v611 = vmul.f32 %v587, 1.442695
    %v612 = vpow.pop %v611
    %v613 = vmul.f32 %v588, 1.442695
    %v614 = vpow.pop %v613
    %v615 = vmul.f32 %v589, 1.442695
    %v616 = vpow.pop %v615
    %v617 = vmul.f32 %v590, 1.442695
    %v618 = vpow.pop %v617
    %v619 = vmul.f32 %v591, 1.442695
    %v620 = vpow.pop %v619
    %v621 = vmul.f32 %v592, 1.442695
    %v622 = vpow.pop %v621
    %v623 = vmul.f32 %v593, 1.442695
    %v624 = vpow.pop %v623
    %v625 = vmul.f32 %v594, 1.442695
    %v626 = vpow.pop %v625
    %v627 = vadd.f32 %v596, 1.0
    %v628 = vadd.f32 %v598, 1.0
    %v629 = vadd.f32 %v600, 1.0
    %v630 = vadd.f32 %v602, 1.0
    %v631 = vadd.f32 %v604, 1.0
    %v632 = vadd.f32 %v606, 1.0
    %v633 = vadd.f32 %v608, 1.0
    %v634 = vadd.f32 %v610, 1.0
    %v635 = vadd.f32 %v612, 1.0
    %v636 = vadd.f32 %v614, 1.0
    %v637 = vadd.f32 %v616, 1.0
    %v638 = vadd.f32 %v618, 1.0
    %v639 = vadd.f32 %v620, 1.0
    %v640 = vadd.f32 %v622, 1.0
    %v641 = vadd.f32 %v624, 1.0
    %v642 = vadd.f32 %v626, 1.0
    %v643 = vrcp.pop %v627
    %v644 = vmul.f32 1.0, %v643
    %v645 = vrcp.pop %v628
    %v646 = vmul.f32 1.0, %v645
    %v647 = vrcp.pop %v629
    %v648 = vmul.f32 1.0, %v647
    %v649 = vrcp.pop %v630
    %v650 = vmul.f32 1.0, %v649
    %v651 = vrcp.pop %v631
    %v652 = vmul.f32 1.0, %v651
    %v653 = vrcp.pop %v632
    %v654 = vmul.f32 1.0, %v653
    %v655 = vrcp.pop %v633
    %v656 = vmul.f32 1.0, %v655
    %v657 = vrcp.pop %v634
    %v658 = vmul.f32 1.0, %v657
    %v659 = vrcp.pop %v635
    %v660 = vmul.f32 1.0, %v659
    %v661 = vrcp.pop %v636
    %v662 = vmul.f32 1.0, %v661
    %v663 = vrcp.pop %v637
    %v664 = vmul.f32 1.0, %v663
    %v665 = vrcp.pop %v638
    %v666 = vmul.f32 1.0, %v665
    %v667 = vrcp.pop %v639
    %v668 = vmul.f32 1.0, %v667
    %v669 = vrcp.pop %v640
    %v670 = vmul.f32 1.0, %v669
    %v671 = vrcp.pop %v641
    %v672 = vmul.f32 1.0, %v671
    %v673 = vrcp.pop %v642
    %v674 = vmul.f32 1.0, %v673
    %v675 = vsub.f32 1.0, %v644
    %v676 = vsub.f32 1.0, %v646
    %v677 = vsub.f32 1.0, %v648
    %v678 = vsub.f32 1.0, %v650
    %v679 = vsub.f32 1.0, %v652
    %v680 = vsub.f32 1.0, %v654
    %v681 = vsub.f32 1.0, %v656
    %v682 = vsub.f32 1.0, %v658
    %v683 = vsub.f32 1.0, %v660
    %v684 = vsub.f32 1.0, %v662
    %v685 = vsub.f32 1.0, %v664
    %v686 = vsub.f32 1.0, %v666
    %v687 = vsub.f32 1.0, %v668
    %v688 = vsub.f32 1.0, %v670
    %v689 = vsub.f32 1.0, %v672
    %v690 = vsub.f32 1.0, %v674
    %v691 = vlaneseq
    %v692 = vand.u32 %v691, 127
    %vm693 = vcmp.eq.s32.totalorder %v692, 0
    %695 = vset.pattern.permute.xlu0 1
    %696 = vperm.xlu0 %695, %v644
    %v697 = vpop.permute.xlu0 %696
    %700 = vset.pattern.permute.xlu0 1
    %701 = vperm.xlu0 %700, %v646
    %v702 = vpop.permute.xlu0 %701
    %705 = vset.pattern.permute.xlu0 1
    %706 = vperm.xlu0 %705, %v648
    %v707 = vpop.permute.xlu0 %706
    %710 = vset.pattern.permute.xlu0 1
    %711 = vperm.xlu0 %710, %v650
    %v712 = vpop.permute.xlu0 %711
    %715 = vset.pattern.permute.xlu0 1
    %716 = vperm.xlu0 %715, %v652
    %v717 = vpop.permute.xlu0 %716
    %720 = vset.pattern.permute.xlu0 1
    %721 = vperm.xlu0 %720, %v654
    %v722 = vpop.permute.xlu0 %721
    %725 = vset.pattern.permute.xlu0 1
    %726 = vperm.xlu0 %725, %v656
    %v727 = vpop.permute.xlu0 %726
    %730 = vset.pattern.permute.xlu0 1
    %731 = vperm.xlu0 %730, %v658
    %v732 = vpop.permute.xlu0 %731
    %735 = vset.pattern.permute.xlu0 1
    %736 = vperm.xlu0 %735, %v660
    %v737 = vpop.permute.xlu0 %736
    %740 = vset.pattern.permute.xlu0 1
    %741 = vperm.xlu0 %740, %v662
    %v742 = vpop.permute.xlu0 %741
    %745 = vset.pattern.permute.xlu0 1
    %746 = vperm.xlu0 %745, %v664
    %v747 = vpop.permute.xlu0 %746
    %750 = vset.pattern.permute.xlu0 1
    %751 = vperm.xlu0 %750, %v666
    %v752 = vpop.permute.xlu0 %751
    %755 = vset.pattern.permute.xlu0 1
    %756 = vperm.xlu0 %755, %v668
    %v757 = vpop.permute.xlu0 %756
    %760 = vset.pattern.permute.xlu0 1
    %761 = vperm.xlu0 %760, %v670
    %v762 = vpop.permute.xlu0 %761
    %765 = vset.pattern.permute.xlu0 1
    %766 = vperm.xlu0 %765, %v672
    %v767 = vpop.permute.xlu0 %766
    %770 = vset.pattern.permute.xlu0 1
    %771 = vperm.xlu0 %770, %v674
    %v772 = vpop.permute.xlu0 %771
    %775 = vset.pattern.permute.xlu0 1
    %776 = vperm.xlu0 %775, %v675
    %v777 = vpop.permute.xlu0 %776
    %780 = vset.pattern.permute.xlu0 1
    %781 = vperm.xlu0 %780, %v676
    %v782 = vpop.permute.xlu0 %781
    %785 = vset.pattern.permute.xlu0 1
    %786 = vperm.xlu0 %785, %v677
    %v787 = vpop.permute.xlu0 %786
    %790 = vset.pattern.permute.xlu0 1
    %791 = vperm.xlu0 %790, %v678
    %v792 = vpop.permute.xlu0 %791
    %795 = vset.pattern.permute.xlu0 1
    %796 = vperm.xlu0 %795, %v679
    %v797 = vpop.permute.xlu0 %796
    %800 = vset.pattern.permute.xlu0 1
    %801 = vperm.xlu0 %800, %v680
    %v802 = vpop.permute.xlu0 %801
    %805 = vset.pattern.permute.xlu0 1
    %806 = vperm.xlu0 %805, %v681
    %v807 = vpop.permute.xlu0 %806
    %810 = vset.pattern.permute.xlu0 1
    %811 = vperm.xlu0 %810, %v682
    %v812 = vpop.permute.xlu0 %811
    %815 = vset.pattern.permute.xlu0 1
    %816 = vperm.xlu0 %815, %v683
    %v817 = vpop.permute.xlu0 %816
    %820 = vset.pattern.permute.xlu0 1
    %821 = vperm.xlu0 %820, %v684
    %v822 = vpop.permute.xlu0 %821
    %825 = vset.pattern.permute.xlu0 1
    %826 = vperm.xlu0 %825, %v685
    %v827 = vpop.permute.xlu0 %826
    %830 = vset.pattern.permute.xlu0 1
    %831 = vperm.xlu0 %830, %v686
    %v832 = vpop.permute.xlu0 %831
    %835 = vset.pattern.permute.xlu0 1
    %836 = vperm.xlu0 %835, %v687
    %v837 = vpop.permute.xlu0 %836
    %840 = vset.pattern.permute.xlu0 1
    %841 = vperm.xlu0 %840, %v688
    %v842 = vpop.permute.xlu0 %841
    %845 = vset.pattern.permute.xlu0 1
    %846 = vperm.xlu0 %845, %v689
    %v847 = vpop.permute.xlu0 %846
    %850 = vset.pattern.permute.xlu0 1
    %851 = vperm.xlu0 %850, %v690
    %v852 = vpop.permute.xlu0 %851
    %v854 = vsel %vm693, %v697, %v777
    %v855 = vsel %vm693, %v702, %v782
    %v856 = vsel %vm693, %v707, %v787
    %v857 = vsel %vm693, %v712, %v792
    %v858 = vsel %vm693, %v717, %v797
    %v859 = vsel %vm693, %v722, %v802
    %v860 = vsel %vm693, %v727, %v807
    %v861 = vsel %vm693, %v732, %v812
    %v862 = vsel %vm693, %v737, %v817
    %v863 = vsel %vm693, %v742, %v822
    %v864 = vsel %vm693, %v747, %v827
    %v865 = vsel %vm693, %v752, %v832
    %v866 = vsel %vm693, %v757, %v837
    %v867 = vsel %vm693, %v762, %v842
    %v868 = vsel %vm693, %v767, %v847
    %v869 = vsel %vm693, %v772, %v852
    %vm870 = vcmask 15360
    %871 = vst.msk [vmem:[%s16] sm:$0xff] %vm870, %v854
    %872 = vst.msk [vmem:[%s16 + $0x8] sm:$0xff] %vm870, %v855
    %873 = vst.msk [vmem:[%s16 + $0x10] sm:$0xff] %vm870, %v856
    %874 = vst.msk [vmem:[%s16 + $0x18] sm:$0xff] %vm870, %v857
    %875 = vst.msk [vmem:[%s16 + $0x20] sm:$0xff] %vm870, %v858
    %876 = vst.msk [vmem:[%s16 + $0x28] sm:$0xff] %vm870, %v859
    %877 = vst.msk [vmem:[%s16 + $0x30] sm:$0xff] %vm870, %v860
    %878 = vst.msk [vmem:[%s16 + $0x38] sm:$0xff] %vm870, %v861
    %879 = vst.msk [vmem:[%s16 + $0x40] sm:$0xff] %vm870, %v862
    %880 = vst.msk [vmem:[%s16 + $0x48] sm:$0xff] %vm870, %v863
    %881 = vst.msk [vmem:[%s16 + $0x50] sm:$0xff] %vm870, %v864
    %882 = vst.msk [vmem:[%s16 + $0x58] sm:$0xff] %vm870, %v865
    %883 = vst.msk [vmem:[%s16 + $0x60] sm:$0xff] %vm870, %v866
    %884 = vst.msk [vmem:[%s16 + $0x68] sm:$0xff] %vm870, %v867
    %885 = vst.msk [vmem:[%s16 + $0x70] sm:$0xff] %vm870, %v868
    %886 = vst.msk [vmem:[%s16 + $0x78] sm:$0xff] %vm870, %v869
    %v887 = vld [vmem:[%s3] sm:$0xff]
    %v888 = vmul.f32 %v697, %v69
    %v889 = vmul.f32 %v702, %v70
    %v890 = vmul.f32 %v707, %v71
    %v891 = vmul.f32 %v712, %v72
    %v892 = vmul.f32 %v717, %v73
    %v893 = vmul.f32 %v722, %v74
    %v894 = vmul.f32 %v727, %v75
    %v895 = vmul.f32 %v732, %v76
    %v896 = vmul.f32 %v737, %v77
    %v897 = vmul.f32 %v742, %v78
    %v898 = vmul.f32 %v747, %v79
    %v899 = vmul.f32 %v752, %v80
    %v900 = vmul.f32 %v757, %v81
    %v901 = vmul.f32 %v762, %v82
    %v902 = vmul.f32 %v767, %v83
    %v903 = vmul.f32 %v772, %v84
    %904 = vmatprep.subr.mxu0 0.0
    %905 = vmatpush1.msra.mxu0 %v888
    %906 = vmatprep.subr.mxu0 0.0
    %907 = vmatpush1.msra.mxu0 %v889
    %908 = vmatprep.subr.mxu0 0.0
    %909 = vmatpush1.msra.mxu0 %v890
    %910 = vmatprep.subr.mxu0 0.0
    %911 = vmatpush1.msra.mxu0 %v891
    %912 = vmatprep.subr.mxu0 0.0
    %913 = vmatpush1.msra.mxu0 %v892
    %914 = vmatprep.subr.mxu0 0.0
    %915 = vmatpush1.msra.mxu0 %v893
    %916 = vmatprep.subr.mxu0 0.0
    %917 = vmatpush1.msra.mxu0 %v894
    %918 = vmatprep.subr.mxu0 0.0
    %919 = vmatpush1.msra.mxu0 %v895
    %920 = vmatprep.subr.mxu0 0.0
    %921 = vmatpush1.msra.mxu0 %v896
    %922 = vmatprep.subr.mxu0 0.0
    %923 = vmatpush1.msra.mxu0 %v897
    %924 = vmatprep.subr.mxu0 0.0
    %925 = vmatpush1.msra.mxu0 %v898
    %926 = vmatprep.subr.mxu0 0.0
    %927 = vmatpush1.msra.mxu0 %v899
    %928 = vmatprep.subr.mxu0 0.0
    %929 = vmatpush1.msra.mxu0 %v900
    %930 = vmatprep.subr.mxu0 0.0
    %931 = vmatpush1.msra.mxu0 %v901
    %932 = vmatprep.subr.mxu0 0.0
    %933 = vmatpush1.msra.mxu0 %v902
    %934 = vmatprep.subr.mxu0 0.0
    %935 = vmatpush1.msra.mxu0 %v903
    %936 = vmatprep.subr.mxu0 0.0
    %937 = vmatpush1.msra.mxu0 0.0
    %938 = vmatprep.subr.mxu0 0.0
    %939 = vmatpush1.msra.mxu0 0.0
    %940 = vmatprep.subr.mxu0 0.0
    %941 = vmatpush1.msra.mxu0 0.0
    %942 = vmatprep.subr.mxu0 0.0
    %943 = vmatpush1.msra.mxu0 0.0
    %944 = vmatprep.subr.mxu0 0.0
    %945 = vmatpush1.msra.mxu0 0.0
    %946 = vmatprep.subr.mxu0 0.0
    %947 = vmatpush1.msra.mxu0 0.0
    %948 = vmatprep.subr.mxu0 0.0
    %949 = vmatpush1.msra.mxu0 0.0
    %950 = vmatprep.subr.mxu0 0.0
    %951 = vmatpush1.msra.mxu0 0.0
    %952 = vmatprep.subr.mxu0 0.0
    %953 = vmatpush1.msra.mxu0 0.0
    %954 = vmatprep.subr.mxu0 0.0
    %955 = vmatpush1.msra.mxu0 0.0
    %956 = vmatprep.subr.mxu0 0.0
    %957 = vmatpush1.msra.mxu0 0.0
    %958 = vmatprep.subr.mxu0 0.0
    %959 = vmatpush1.msra.mxu0 0.0
    %960 = vmatprep.subr.mxu0 0.0
    %961 = vmatpush1.msra.mxu0 0.0
    %962 = vmatprep.subr.mxu0 0.0
    %963 = vmatpush1.msra.mxu0 0.0
    %964 = vmatprep.subr.mxu0 0.0
    %965 = vmatpush1.msra.mxu0 0.0
    %966 = vmatprep.subr.mxu0 0.0
    %967 = vmatpush1.msra.mxu0 0.0
    %968 = vmatprep.mubr.f32.mxu0 0.0
    %969 = vmatmul.mubr.f32.gmra.mrb[0].mxu0 %v887
    %v970 = vpop.f32.mrb[0].mxu0
    %v971 = vadd.f32 0.0, %v970
    %v972 = vpop.f32.mrb[0].mxu0
    %973 = vdwg.mxu0
    %v974 = vmul.f32 %v971, 0.0625
    %975 = vmatprep.subr.mxu0 0.0
    %976 = vmatpush1.msra.mxu0 %v69
    %977 = vmatprep.subr.mxu0 0.0
    %978 = vmatpush1.msra.mxu0 %v70
    %979 = vmatprep.subr.mxu0 0.0
    %980 = vmatpush1.msra.mxu0 %v71
    %981 = vmatprep.subr.mxu0 0.0
    %982 = vmatpush1.msra.mxu0 %v72
    %983 = vmatprep.subr.mxu0 0.0
    %984 = vmatpush1.msra.mxu0 %v73
    %985 = vmatprep.subr.mxu0 0.0
    %986 = vmatpush1.msra.mxu0 %v74
    %987 = vmatprep.subr.mxu0 0.0
    %988 = vmatpush1.msra.mxu0 %v75
    %989 = vmatprep.subr.mxu0 0.0
    %990 = vmatpush1.msra.mxu0 %v76
    %991 = vmatprep.subr.mxu0 0.0
    %992 = vmatpush1.msra.mxu0 %v77
    %993 = vmatprep.subr.mxu0 0.0
    %994 = vmatpush1.msra.mxu0 %v78
    %995 = vmatprep.subr.mxu0 0.0
    %996 = vmatpush1.msra.mxu0 %v79
    %997 = vmatprep.subr.mxu0 0.0
    %998 = vmatpush1.msra.mxu0 %v80
    %999 = vmatprep.subr.mxu0 0.0
    %1000 = vmatpush1.msra.mxu0 %v81
    %1001 = vmatprep.subr.mxu0 0.0
    %1002 = vmatpush1.msra.mxu0 %v82
    %1003 = vmatprep.subr.mxu0 0.0
    %1004 = vmatpush1.msra.mxu0 %v83
    %1005 = vmatprep.subr.mxu0 0.0
    %1006 = vmatpush1.msra.mxu0 %v84
    %1007 = vmatprep.subr.mxu0 0.0
    %1008 = vmatpush1.msra.mxu0 0.0
    %1009 = vmatprep.subr.mxu0 0.0
    %1010 = vmatpush1.msra.mxu0 0.0
    %1011 = vmatprep.subr.mxu0 0.0
    %1012 = vmatpush1.msra.mxu0 0.0
    %1013 = vmatprep.subr.mxu0 0.0
    %1014 = vmatpush1.msra.mxu0 0.0
    %1015 = vmatprep.subr.mxu0 0.0
    %1016 = vmatpush1.msra.mxu0 0.0
    %1017 = vmatprep.subr.mxu0 0.0
    %1018 = vmatpush1.msra.mxu0 0.0
    %1019 = vmatprep.subr.mxu0 0.0
    %1020 = vmatpush1.msra.mxu0 0.0
    %1021 = vmatprep.subr.mxu0 0.0
    %1022 = vmatpush1.msra.mxu0 0.0
    %1023 = vmatprep.subr.mxu0 0.0
    %1024 = vmatpush1.msra.mxu0 0.0
    %1025 = vmatprep.subr.mxu0 0.0
    %1026 = vmatpush1.msra.mxu0 0.0
    %1027 = vmatprep.subr.mxu0 0.0
    %1028 = vmatpush1.msra.mxu0 0.0
    %1029 = vmatprep.subr.mxu0 0.0
    %1030 = vmatpush1.msra.mxu0 0.0
    %1031 = vmatprep.subr.mxu0 0.0
    %1032 = vmatpush1.msra.mxu0 0.0
    %1033 = vmatprep.subr.mxu0 0.0
    %1034 = vmatpush1.msra.mxu0 0.0
    %1035 = vmatprep.subr.mxu0 0.0
    %1036 = vmatpush1.msra.mxu0 0.0
    %1037 = vmatprep.subr.mxu0 0.0
    %1038 = vmatpush1.msra.mxu0 0.0
    %1039 = vmatprep.mubr.f32.mxu0 0.0
    %1040 = vmatmul.mubr.f32.gmra.mrb[0].mxu0 %v887
    %v1041 = vpop.f32.mrb[0].mxu0
    %v1042 = vadd.f32 0.0, %v1041
    %v1043 = vpop.f32.mrb[0].mxu0
    %1044 = vdwg.mxu0
    %v1045 = vmul.f32 %v1042, 0.0625
    %1046 = vst.msk [vmem:[%s15] sm:$0xff] %vm321, %v974
    %1047 = vst.msk [vmem:[%s15 + $0x8] sm:$0xff] %vm321, %v1045
    %v1048 = vld [vmem:[%s2] sm:$0xff]
    %v1049 = vld [vmem:[%s2 + $0x8] sm:$0xff]
    %v1050 = vld [vmem:[%s2 + $0x10] sm:$0xff]
    %v1051 = vld [vmem:[%s2 + $0x18] sm:$0xff]
    %v1052 = vld [vmem:[%s2 + $0x20] sm:$0xff]
    %v1053 = vld [vmem:[%s2 + $0x28] sm:$0xff]
    %v1054 = vld [vmem:[%s2 + $0x30] sm:$0xff]
    %v1055 = vld [vmem:[%s2 + $0x38] sm:$0xff]
    %v1056 = vld [vmem:[%s2 + $0x40] sm:$0xff]
    %v1057 = vld [vmem:[%s2 + $0x48] sm:$0xff]
    %v1058 = vld [vmem:[%s2 + $0x50] sm:$0xff]
    %v1059 = vld [vmem:[%s2 + $0x58] sm:$0xff]
    %v1060 = vld [vmem:[%s2 + $0x60] sm:$0xff]
    %v1061 = vld [vmem:[%s2 + $0x68] sm:$0xff]
    %v1062 = vld [vmem:[%s2 + $0x70] sm:$0xff]
    %v1063 = vld [vmem:[%s2 + $0x78] sm:$0xff]
    %1064 = vmatprep.subr.mxu0 0.0
    %1065 = vmatpush1.msra.mxu0 %v854
    %1066 = vmatprep.subr.mxu0 0.0
    %1067 = vmatpush1.msra.mxu0 %v855
    %1068 = vmatprep.subr.mxu0 0.0
    %1069 = vmatpush1.msra.mxu0 %v856
    %1070 = vmatprep.subr.mxu0 0.0
    %1071 = vmatpush1.msra.mxu0 %v857
    %1072 = vmatprep.subr.mxu0 0.0
    %1073 = vmatpush1.msra.mxu0 %v858
    %1074 = vmatprep.subr.mxu0 0.0
    %1075 = vmatpush1.msra.mxu0 %v859
    %1076 = vmatprep.subr.mxu0 0.0
    %1077 = vmatpush1.msra.mxu0 %v860
    %1078 = vmatprep.subr.mxu0 0.0
    %1079 = vmatpush1.msra.mxu0 %v861
    %1080 = vmatprep.subr.mxu0 0.0
    %1081 = vmatpush1.msra.mxu0 %v862
    %1082 = vmatprep.subr.mxu0 0.0
    %1083 = vmatpush1.msra.mxu0 %v863
    %1084 = vmatprep.subr.mxu0 0.0
    %1085 = vmatpush1.msra.mxu0 %v864
    %1086 = vmatprep.subr.mxu0 0.0
    %1087 = vmatpush1.msra.mxu0 %v865
    %1088 = vmatprep.subr.mxu0 0.0
    %1089 = vmatpush1.msra.mxu0 %v866
    %1090 = vmatprep.subr.mxu0 0.0
    %1091 = vmatpush1.msra.mxu0 %v867
    %1092 = vmatprep.subr.mxu0 0.0
    %1093 = vmatpush1.msra.mxu0 %v868
    %1094 = vmatprep.subr.mxu0 0.0
    %1095 = vmatpush1.msra.mxu0 %v869
    %1096 = vmatprep.subr.mxu0 0.0
    %1097 = vmatpush1.msra.mxu0 0.0
    %1098 = vmatprep.subr.mxu0 0.0
    %1099 = vmatpush1.msra.mxu0 0.0
    %1100 = vmatprep.subr.mxu0 0.0
    %1101 = vmatpush1.msra.mxu0 0.0
    %1102 = vmatprep.subr.mxu0 0.0
    %1103 = vmatpush1.msra.mxu0 0.0
    %1104 = vmatprep.subr.mxu0 0.0
    %1105 = vmatpush1.msra.mxu0 0.0
    %1106 = vmatprep.subr.mxu0 0.0
    %1107 = vmatpush1.msra.mxu0 0.0
    %1108 = vmatprep.subr.mxu0 0.0
    %1109 = vmatpush1.msra.mxu0 0.0
    %1110 = vmatprep.subr.mxu0 0.0
    %1111 = vmatpush1.msra.mxu0 0.0
    %1112 = vmatprep.subr.mxu0 0.0
    %1113 = vmatpush1.msra.mxu0 0.0
    %1114 = vmatprep.subr.mxu0 0.0
    %1115 = vmatpush1.msra.mxu0 0.0
    %1116 = vmatprep.subr.mxu0 0.0
    %1117 = vmatpush1.msra.mxu0 0.0
    %1118 = vmatprep.subr.mxu0 0.0
    %1119 = vmatpush1.msra.mxu0 0.0
    %1120 = vmatprep.subr.mxu0 0.0
    %1121 = vmatpush1.msra.mxu0 0.0
    %1122 = vmatprep.subr.mxu0 0.0
    %1123 = vmatpush1.msra.mxu0 0.0
    %1124 = vmatprep.subr.mxu0 0.0
    %1125 = vmatpush1.msra.mxu0 0.0
    %1126 = vmatprep.subr.mxu0 0.0
    %1127 = vmatpush1.msra.mxu0 0.0
    %1128 = vmatprep.mubr.f32.mxu0 0.0
    %1129 = vmatmul.mubr.f32.gmra.mrb[0].mxu0 %v1048
    %v1130 = vpop.f32.mrb[0].mxu0
    %v1131 = vadd.f32 0.0, %v1130
    %v1132 = vpop.f32.mrb[0].mxu0
    %1133 = vmatprep.mubr.f32.mxu0 0.0
    %1134 = vmatmul.mubr.f32.gmra.mrb[0].mxu0 %v1049
    %v1135 = vpop.f32.mrb[0].mxu0
    %v1136 = vadd.f32 0.0, %v1135
    %v1137 = vpop.f32.mrb[0].mxu0
    %1138 = vmatprep.mubr.f32.mxu0 0.0
    %1139 = vmatmul.mubr.f32.gmra.mrb[0].mxu0 %v1050
    %v1140 = vpop.f32.mrb[0].mxu0
    %v1141 = vadd.f32 0.0, %v1140
    %v1142 = vpop.f32.mrb[0].mxu0
    %1143 = vmatprep.mubr.f32.mxu0 0.0
    %1144 = vmatmul.mubr.f32.gmra.mrb[0].mxu0 %v1051
    %v1145 = vpop.f32.mrb[0].mxu0
    %v1146 = vadd.f32 0.0, %v1145
    %v1147 = vpop.f32.mrb[0].mxu0
    %1148 = vmatprep.mubr.f32.mxu0 0.0
    %1149 = vmatmul.mubr.f32.gmra.mrb[0].mxu0 %v1052
    %v1150 = vpop.f32.mrb[0].mxu0
    %v1151 = vadd.f32 0.0, %v1150
    %v1152 = vpop.f32.mrb[0].mxu0
    %1153 = vmatprep.mubr.f32.mxu0 0.0
    %1154 = vmatmul.mubr.f32.gmra.mrb[0].mxu0 %v1053
    %v1155 = vpop.f32.mrb[0].mxu0
    %v1156 = vadd.f32 0.0, %v1155
    %v1157 = vpop.f32.mrb[0].mxu0
    %1158 = vmatprep.mubr.f32.mxu0 0.0
    %1159 = vmatmul.mubr.f32.gmra.mrb[0].mxu0 %v1054
    %v1160 = vpop.f32.mrb[0].mxu0
    %v1161 = vadd.f32 0.0, %v1160
    %v1162 = vpop.f32.mrb[0].mxu0
    %1163 = vmatprep.mubr.f32.mxu0 0.0
    %1164 = vmatmul.mubr.f32.gmra.mrb[0].mxu0 %v1055
    %v1165 = vpop.f32.mrb[0].mxu0
    %v1166 = vadd.f32 0.0, %v1165
    %v1167 = vpop.f32.mrb[0].mxu0
    %1168 = vmatprep.mubr.f32.mxu0 0.0
    %1169 = vmatmul.mubr.f32.gmra.mrb[0].mxu0 %v1056
    %v1170 = vpop.f32.mrb[0].mxu0
    %v1171 = vadd.f32 0.0, %v1170
    %v1172 = vpop.f32.mrb[0].mxu0
    %1173 = vmatprep.mubr.f32.mxu0 0.0
    %1174 = vmatmul.mubr.f32.gmra.mrb[0].mxu0 %v1057
    %v1175 = vpop.f32.mrb[0].mxu0
    %v1176 = vadd.f32 0.0, %v1175
    %v1177 = vpop.f32.mrb[0].mxu0
    %1178 = vmatprep.mubr.f32.mxu0 0.0
    %1179 = vmatmul.mubr.f32.gmra.mrb[0].mxu0 %v1058
    %v1180 = vpop.f32.mrb[0].mxu0
    %v1181 = vadd.f32 0.0, %v1180
    %v1182 = vpop.f32.mrb[0].mxu0
    %1183 = vmatprep.mubr.f32.mxu0 0.0
    %1184 = vmatmul.mubr.f32.gmra.mrb[0].mxu0 %v1059
    %v1185 = vpop.f32.mrb[0].mxu0
    %v1186 = vadd.f32 0.0, %v1185
    %v1187 = vpop.f32.mrb[0].mxu0
    %1188 = vmatprep.mubr.f32.mxu0 0.0
    %1189 = vmatmul.mubr.f32.gmra.mrb[0].mxu0 %v1060
    %v1190 = vpop.f32.mrb[0].mxu0
    %v1191 = vadd.f32 0.0, %v1190
    %v1192 = vpop.f32.mrb[0].mxu0
    %1193 = vmatprep.mubr.f32.mxu0 0.0
    %1194 = vmatmul.mubr.f32.gmra.mrb[0].mxu0 %v1061
    %v1195 = vpop.f32.mrb[0].mxu0
    %v1196 = vadd.f32 0.0, %v1195
    %v1197 = vpop.f32.mrb[0].mxu0
    %1198 = vmatprep.mubr.f32.mxu0 0.0
    %1199 = vmatmul.mubr.f32.gmra.mrb[0].mxu0 %v1062
    %v1200 = vpop.f32.mrb[0].mxu0
    %v1201 = vadd.f32 0.0, %v1200
    %v1202 = vpop.f32.mrb[0].mxu0
    %1203 = vmatprep.mubr.f32.mxu0 0.0
    %1204 = vmatmul.mubr.f32.gmra.mrb[0].mxu0 %v1063
    %v1205 = vpop.f32.mrb[0].mxu0
    %v1206 = vadd.f32 0.0, %v1205
    %v1207 = vpop.f32.mrb[0].mxu0
    %1208 = vdwg.mxu0
    %v1209 = vmul.f32 %v697, %v1131
    %v1210 = vmul.f32 %v702, %v1136
    %v1211 = vmul.f32 %v707, %v1141
    %v1212 = vmul.f32 %v712, %v1146
    %v1213 = vmul.f32 %v717, %v1151
    %v1214 = vmul.f32 %v722, %v1156
    %v1215 = vmul.f32 %v727, %v1161
    %v1216 = vmul.f32 %v732, %v1166
    %v1217 = vmul.f32 %v737, %v1171
    %v1218 = vmul.f32 %v742, %v1176
    %v1219 = vmul.f32 %v747, %v1181
    %v1220 = vmul.f32 %v752, %v1186
    %v1221 = vmul.f32 %v757, %v1191
    %v1222 = vmul.f32 %v762, %v1196
    %v1223 = vmul.f32 %v767, %v1201
    %v1224 = vmul.f32 %v772, %v1206
    %1225 = vmatprep.subr.mxu0 0.0
    %1226 = vmatpush1.msra.mxu0 %v1209
    %1227 = vmatprep.subr.mxu0 0.0
    %1228 = vmatpush1.msra.mxu0 %v1210
    %1229 = vmatprep.subr.mxu0 0.0
    %1230 = vmatpush1.msra.mxu0 %v1211
    %1231 = vmatprep.subr.mxu0 0.0
    %1232 = vmatpush1.msra.mxu0 %v1212
    %1233 = vmatprep.subr.mxu0 0.0
    %1234 = vmatpush1.msra.mxu0 %v1213
    %1235 = vmatprep.subr.mxu0 0.0
    %1236 = vmatpush1.msra.mxu0 %v1214
    %1237 = vmatprep.subr.mxu0 0.0
    %1238 = vmatpush1.msra.mxu0 %v1215
    %1239 = vmatprep.subr.mxu0 0.0
    %1240 = vmatpush1.msra.mxu0 %v1216
    %1241 = vmatprep.subr.mxu0 0.0
    %1242 = vmatpush1.msra.mxu0 %v1217
    %1243 = vmatprep.subr.mxu0 0.0
    %1244 = vmatpush1.msra.mxu0 %v1218
    %1245 = vmatprep.subr.mxu0 0.0
    %1246 = vmatpush1.msra.mxu0 %v1219
    %1247 = vmatprep.subr.mxu0 0.0
    %1248 = vmatpush1.msra.mxu0 %v1220
    %1249 = vmatprep.subr.mxu0 0.0
    %1250 = vmatpush1.msra.mxu0 %v1221
    %1251 = vmatprep.subr.mxu0 0.0
    %1252 = vmatpush1.msra.mxu0 %v1222
    %1253 = vmatprep.subr.mxu0 0.0
    %1254 = vmatpush1.msra.mxu0 %v1223
    %1255 = vmatprep.subr.mxu0 0.0
    %1256 = vmatpush1.msra.mxu0 %v1224
    %1257 = vmatprep.subr.mxu0 0.0
    %1258 = vmatpush1.msra.mxu0 0.0
    %1259 = vmatprep.subr.mxu0 0.0
    %1260 = vmatpush1.msra.mxu0 0.0
    %1261 = vmatprep.subr.mxu0 0.0
    %1262 = vmatpush1.msra.mxu0 0.0
    %1263 = vmatprep.subr.mxu0 0.0
    %1264 = vmatpush1.msra.mxu0 0.0
    %1265 = vmatprep.subr.mxu0 0.0
    %1266 = vmatpush1.msra.mxu0 0.0
    %1267 = vmatprep.subr.mxu0 0.0
    %1268 = vmatpush1.msra.mxu0 0.0
    %1269 = vmatprep.subr.mxu0 0.0
    %1270 = vmatpush1.msra.mxu0 0.0
    %1271 = vmatprep.subr.mxu0 0.0
    %1272 = vmatpush1.msra.mxu0 0.0
    %1273 = vmatprep.subr.mxu0 0.0
    %1274 = vmatpush1.msra.mxu0 0.0
    %1275 = vmatprep.subr.mxu0 0.0
    %1276 = vmatpush1.msra.mxu0 0.0
    %1277 = vmatprep.subr.mxu0 0.0
    %1278 = vmatpush1.msra.mxu0 0.0
    %1279 = vmatprep.subr.mxu0 0.0
    %1280 = vmatpush1.msra.mxu0 0.0
    %1281 = vmatprep.subr.mxu0 0.0
    %1282 = vmatpush1.msra.mxu0 0.0
    %1283 = vmatprep.subr.mxu0 0.0
    %1284 = vmatpush1.msra.mxu0 0.0
    %1285 = vmatprep.subr.mxu0 0.0
    %1286 = vmatpush1.msra.mxu0 0.0
    %1287 = vmatprep.subr.mxu0 0.0
    %1288 = vmatpush1.msra.mxu0 0.0
    %1289 = vmatprep.mubr.f32.mxu0 0.0
    %1290 = vmatmul.mubr.f32.gmra.mrb[0].mxu0 %v887
    %v1291 = vpop.f32.mrb[0].mxu0
    %v1292 = vadd.f32 0.0, %v1291
    %v1293 = vpop.f32.mrb[0].mxu0
    %1294 = vdwg.mxu0
    %v1295 = vmul.f32 %v777, %v1131
    %v1296 = vmul.f32 %v782, %v1136
    %v1297 = vmul.f32 %v787, %v1141
    %v1298 = vmul.f32 %v792, %v1146
    %v1299 = vmul.f32 %v797, %v1151
    %v1300 = vmul.f32 %v802, %v1156
    %v1301 = vmul.f32 %v807, %v1161
    %v1302 = vmul.f32 %v812, %v1166
    %v1303 = vmul.f32 %v817, %v1171
    %v1304 = vmul.f32 %v822, %v1176
    %v1305 = vmul.f32 %v827, %v1181
    %v1306 = vmul.f32 %v832, %v1186
    %v1307 = vmul.f32 %v837, %v1191
    %v1308 = vmul.f32 %v842, %v1196
    %v1309 = vmul.f32 %v847, %v1201
    %v1310 = vmul.f32 %v852, %v1206
    %1311 = vmatprep.subr.mxu0 0.0
    %1312 = vmatpush1.msra.mxu0 %v1295
    %1313 = vmatprep.subr.mxu0 0.0
    %1314 = vmatpush1.msra.mxu0 %v1296
    %1315 = vmatprep.subr.mxu0 0.0
    %1316 = vmatpush1.msra.mxu0 %v1297
    %1317 = vmatprep.subr.mxu0 0.0
    %1318 = vmatpush1.msra.mxu0 %v1298
    %1319 = vmatprep.subr.mxu0 0.0
    %1320 = vmatpush1.msra.mxu0 %v1299
    %1321 = vmatprep.subr.mxu0 0.0
    %1322 = vmatpush1.msra.mxu0 %v1300
    %1323 = vmatprep.subr.mxu0 0.0
    %1324 = vmatpush1.msra.mxu0 %v1301
    %1325 = vmatprep.subr.mxu0 0.0
    %1326 = vmatpush1.msra.mxu0 %v1302
    %1327 = vmatprep.subr.mxu0 0.0
    %1328 = vmatpush1.msra.mxu0 %v1303
    %1329 = vmatprep.subr.mxu0 0.0
    %1330 = vmatpush1.msra.mxu0 %v1304
    %1331 = vmatprep.subr.mxu0 0.0
    %1332 = vmatpush1.msra.mxu0 %v1305
    %1333 = vmatprep.subr.mxu0 0.0
    %1334 = vmatpush1.msra.mxu0 %v1306
    %1335 = vmatprep.subr.mxu0 0.0
    %1336 = vmatpush1.msra.mxu0 %v1307
    %1337 = vmatprep.subr.mxu0 0.0
    %1338 = vmatpush1.msra.mxu0 %v1308
    %1339 = vmatprep.subr.mxu0 0.0
    %1340 = vmatpush1.msra.mxu0 %v1309
    %1341 = vmatprep.subr.mxu0 0.0
    %1342 = vmatpush1.msra.mxu0 %v1310
    %1343 = vmatprep.subr.mxu0 0.0
    %1344 = vmatpush1.msra.mxu0 0.0
    %1345 = vmatprep.subr.mxu0 0.0
    %1346 = vmatpush1.msra.mxu0 0.0
    %1347 = vmatprep.subr.mxu0 0.0
    %1348 = vmatpush1.msra.mxu0 0.0
    %1349 = vmatprep.subr.mxu0 0.0
    %1350 = vmatpush1.msra.mxu0 0.0
    %1351 = vmatprep.subr.mxu0 0.0
    %1352 = vmatpush1.msra.mxu0 0.0
    %1353 = vmatprep.subr.mxu0 0.0
    %1354 = vmatpush1.msra.mxu0 0.0
    %1355 = vmatprep.subr.mxu0 0.0
    %1356 = vmatpush1.msra.mxu0 0.0
    %1357 = vmatprep.subr.mxu0 0.0
    %1358 = vmatpush1.msra.mxu0 0.0
    %1359 = vmatprep.subr.mxu0 0.0
    %1360 = vmatpush1.msra.mxu0 0.0
    %1361 = vmatprep.subr.mxu0 0.0
    %1362 = vmatpush1.msra.mxu0 0.0
    %1363 = vmatprep.subr.mxu0 0.0
    %1364 = vmatpush1.msra.mxu0 0.0
    %1365 = vmatprep.subr.mxu0 0.0
    %1366 = vmatpush1.msra.mxu0 0.0
    %1367 = vmatprep.subr.mxu0 0.0
    %1368 = vmatpush1.msra.mxu0 0.0
    %1369 = vmatprep.subr.mxu0 0.0
    %1370 = vmatpush1.msra.mxu0 0.0
    %1371 = vmatprep.subr.mxu0 0.0
    %1372 = vmatpush1.msra.mxu0 0.0
    %1373 = vmatprep.subr.mxu0 0.0
    %1374 = vmatpush1.msra.mxu0 0.0
    %1375 = vmatprep.mubr.f32.mxu0 0.0
    %1376 = vmatmul.mubr.f32.gmra.mrb[0].mxu0 %v887
    %v1377 = vpop.f32.mrb[0].mxu0
    %v1378 = vadd.f32 0.0, %v1377
    %v1379 = vpop.f32.mrb[0].mxu0
    %1380 = vdwg.mxu0
    %v1381 = vand.u32 2147483647, %v1292
    %1383 = vrot.lane.b32.xlu0 %v1381, 127
    %v1384 = vpop.permute.xlu0 %1383
    %v1386 = vadd.f32 %v1381, %v1384
    %v1387 = vmax.f32 %v1386, 1e-05
    %v1388 = vand.u32 2147483647, %v1378
    %1390 = vrot.lane.b32.xlu0 %v1388, 127
    %v1391 = vpop.permute.xlu0 %1390
    %v1393 = vadd.f32 %v1388, %v1391
    %v1394 = vmax.f32 %v1393, 1e-05
    %v1395 = vrcp.pop %v1387
    %v1396 = vmul.f32 %v1292, %v1395
    %1398 = vrot.lane.b32.xlu0 %v1394, 1
    %v1399 = vpop.permute.xlu0 %1398
    %v1401 = vrcp.pop %v1399
    %v1402 = vmul.f32 %v1378, %v1401
    %v1403 = vsub.f32 %v1396, 1.0
    %v1404 = vmul.f32 %v1403, %v1403
    %v1405 = vsub.f32 %v1402, 1.0
    %v1406 = vmul.f32 %v1405, %v1405
    %1408 = vrot.lane.b32.xlu0 %v1406, 127
    %v1409 = vpop.permute.xlu0 %1408
    %v1411 = vadd.f32 %v1404, %v1409
    %v1412 = vmul.f32 %v1411, 0.5
    %v1413 = vld [vmem:[%s4] sm:$0xff]
    %v1414 = vld [vmem:[%s5] sm:$0x1]
    %1415 = vset.pattern.permute.xlu0 0
    %1416 = vperm.xlu0 %1415, %v1413
    %v1417 = vpop.permute.xlu0 %1416
    %v1418 = vlaneseq
    %v1419 = vshrl.u32 %v1418, 7
    %v1420 = vsub.s32 0, %v1419
    %v1421 = vrot.slane %v1414, %v1420
    %vm1422 = vcmp.eq.s32.totalorder %v1417, %v1421
    %v1423 = vsel %vm1422, 1, 0
    %v1424 = vcvt.s32.f32 %v1423
    %vm1425 = vcmask 64512
    %v1426 = vsel %vm1425, %v1424, 0.0
    %1427 = vadd.xlane.f32.xlu0 %v1426
    %v1428 = vpop.xlane.xlu0 %1427
    %v1429 = vrcp.pop %v1428
    %v1430 = vmul.f32 0.5, %v1429
    %v1431 = vmul.f32 %v1430, %v1412
    %vm1432 = vcmask 7168
    %v1433 = vsel %vm1432, %v1431, 0.0
    %1434 = vadd.xlane.f32.xlu0 %v1433
    %v1435 = vpop.xlane.xlu0 %1434
    %v1436 = vrot.slane %v1435, 4
    %v1437 = vadd.f32 %v1435, %v1436
    %v1438 = vrot.slane %v1437, 2
    %v1439 = vadd.f32 %v1437, %v1438
    %v1440 = vrot.slane %v1439, 1
    %v1441 = vadd.f32 %v1439, %v1440
    %s1442 = vtos %v1441
    %v1443 = vstv %s1442
    %vm1444 = vcmask 0
    %1445 = vst.msk [vmem:[#allocation4] sm:$0x1] %vm1444, %v1443
    %v1446 = vld [vmem:[%s10] sm:$0xff]
    %v1447 = vld [vmem:[%s10 + $0x8] sm:$0xff]
    %v1448 = vld [vmem:[%s10 + $0x10] sm:$0xff]
    %v1449 = vld [vmem:[%s10 + $0x18] sm:$0xff]
    %v1450 = vld [vmem:[%s11] sm:$0x1]
    %v1452 = vlaneseq
    %v1453 = vshrl.u32 %v1452, 7
    %v1454 = vsub.s32 0, %v1453
    %v1455 = vrot.slane %v1450, %v1454
    %v1458 = vsel %vm321, %v974, 0
    %1460 = vmatprep.subr.mxu0 0.0
    %1461 = vmatpush1.msra.mxu0 %v1446
    %1462 = vmatprep.subr.mxu0 0.0
    %1463 = vmatpush1.msra.mxu0 %v1447
    %1464 = vmatprep.subr.mxu0 0.0
    %1465 = vmatpush1.msra.mxu0 %v1448
    %1466 = vmatprep.subr.mxu0 0.0
    %1467 = vmatpush1.msra.mxu0 %v1449
    %1468 = vmatprep.subr.mxu0 0.0
    %1469 = vmatpush1.msra.mxu0 0.0
    %1470 = vmatprep.subr.mxu0 0.0
    %1471 = vmatpush1.msra.mxu0 0.0
    %1472 = vmatprep.subr.mxu0 0.0
    %1473 = vmatpush1.msra.mxu0 0.0
    %1474 = vmatprep.subr.mxu0 0.0
    %1475 = vmatpush1.msra.mxu0 0.0
    %1476 = vmatprep.subr.mxu0 0.0
    %1477 = vmatpush1.msra.mxu0 0.0
    %1478 = vmatprep.subr.mxu0 0.0
    %1479 = vmatpush1.msra.mxu0 0.0
    %1480 = vmatprep.subr.mxu0 0.0
    %1481 = vmatpush1.msra.mxu0 0.0
    %1482 = vmatprep.subr.mxu0 0.0
    %1483 = vmatpush1.msra.mxu0 0.0
    %1484 = vmatprep.subr.mxu0 0.0
    %1485 = vmatpush1.msra.mxu0 0.0
    %1486 = vmatprep.subr.mxu0 0.0
    %1487 = vmatpush1.msra.mxu0 0.0
    %1488 = vmatprep.subr.mxu0 0.0
    %1489 = vmatpush1.msra.mxu0 0.0
    %1490 = vmatprep.subr.mxu0 0.0
    %1491 = vmatpush1.msra.mxu0 0.0
    %1492 = vmatprep.subr.mxu0 0.0
    %1493 = vmatpush1.msra.mxu0 0.0
    %1494 = vmatprep.subr.mxu0 0.0
    %1495 = vmatpush1.msra.mxu0 0.0
    %1496 = vmatprep.subr.mxu0 0.0
    %1497 = vmatpush1.msra.mxu0 0.0
    %1498 = vmatprep.subr.mxu0 0.0
    %1499 = vmatpush1.msra.mxu0 0.0
    %1500 = vmatprep.subr.mxu0 0.0
    %1501 = vmatpush1.msra.mxu0 0.0
    %1502 = vmatprep.subr.mxu0 0.0
    %1503 = vmatpush1.msra.mxu0 0.0
    %1504 = vmatprep.subr.mxu0 0.0
    %1505 = vmatpush1.msra.mxu0 0.0
    %1506 = vmatprep.subr.mxu0 0.0
    %1507 = vmatpush1.msra.mxu0 0.0
    %1508 = vmatprep.subr.mxu0 0.0
    %1509 = vmatpush1.msra.mxu0 0.0
    %1510 = vmatprep.subr.mxu0 0.0
    %1511 = vmatpush1.msra.mxu0 0.0
    %1512 = vmatprep.subr.mxu0 0.0
    %1513 = vmatpush1.msra.mxu0 0.0
    %1514 = vmatprep.subr.mxu0 0.0
    %1515 = vmatpush1.msra.mxu0 0.0
    %1516 = vmatprep.subr.mxu0 0.0
    %1517 = vmatpush1.msra.mxu0 0.0
    %1518 = vmatprep.subr.mxu0 0.0
    %1519 = vmatpush1.msra.mxu0 0.0
    %1520 = vmatprep.subr.mxu0 0.0
    %1521 = vmatpush1.msra.mxu0 0.0
    %1522 = vmatprep.subr.mxu0 0.0
    %1523 = vmatpush1.msra.mxu0 0.0
    %1524 = vmatprep.mubr.f32.mxu0 0.0
    %1525 = vmatmul.mubr.f32.gmra.mrb[0].mxu0 %v1458
    %v1526 = vpop.f32.mrb[0].mxu0
    %v1527 = vadd.f32 %v1455, %v1526
    %v1528 = vpop.f32.mrb[0].mxu0
    %1529 = vdwg.mxu0
    %v1530 = vmax.f32 %v1527, 0.0
    %v1531 = vld [vmem:[%s12] sm:$0xff]
    %v1532 = vld [vmem:[%s12 + $0x8] sm:$0xff]
    %v1533 = vld [vmem:[%s12 + $0x10] sm:$0xff]
    %v1534 = vld [vmem:[%s12 + $0x18] sm:$0xff]
    %v1535 = vld [vmem:[%s13] sm:$0x1]
    %v1537 = vlaneseq
    %v1538 = vshrl.u32 %v1537, 7
    %v1539 = vsub.s32 0, %v1538
    %v1540 = vrot.slane %v1535, %v1539
    %v1543 = vsel %vm321, %v1530, 0
    %1545 = vmatprep.subr.mxu0 0.0
    %1546 = vmatpush1.msra.mxu0 %v1531
    %1547 = vmatprep.subr.mxu0 0.0
    %1548 = vmatpush1.msra.mxu0 %v1532
    %1549 = vmatprep.subr.mxu0 0.0
    %1550 = vmatpush1.msra.mxu0 %v1533
    %1551 = vmatprep.subr.mxu0 0.0
    %1552 = vmatpush1.msra.mxu0 %v1534
    %1553 = vmatprep.subr.mxu0 0.0
    %1554 = vmatpush1.msra.mxu0 0.0
    %1555 = vmatprep.subr.mxu0 0.0
    %1556 = vmatpush1.msra.mxu0 0.0
    %1557 = vmatprep.subr.mxu0 0.0
    %1558 = vmatpush1.msra.mxu0 0.0
    %1559 = vmatprep.subr.mxu0 0.0
    %1560 = vmatpush1.msra.mxu0 0.0
    %1561 = vmatprep.subr.mxu0 0.0
    %1562 = vmatpush1.msra.mxu0 0.0
    %1563 = vmatprep.subr.mxu0 0.0
    %1564 = vmatpush1.msra.mxu0 0.0
    %1565 = vmatprep.subr.mxu0 0.0
    %1566 = vmatpush1.msra.mxu0 0.0
    %1567 = vmatprep.subr.mxu0 0.0
    %1568 = vmatpush1.msra.mxu0 0.0
    %1569 = vmatprep.subr.mxu0 0.0
    %1570 = vmatpush1.msra.mxu0 0.0
    %1571 = vmatprep.subr.mxu0 0.0
    %1572 = vmatpush1.msra.mxu0 0.0
    %1573 = vmatprep.subr.mxu0 0.0
    %1574 = vmatpush1.msra.mxu0 0.0
    %1575 = vmatprep.subr.mxu0 0.0
    %1576 = vmatpush1.msra.mxu0 0.0
    %1577 = vmatprep.subr.mxu0 0.0
    %1578 = vmatpush1.msra.mxu0 0.0
    %1579 = vmatprep.subr.mxu0 0.0
    %1580 = vmatpush1.msra.mxu0 0.0
    %1581 = vmatprep.subr.mxu0 0.0
    %1582 = vmatpush1.msra.mxu0 0.0
    %1583 = vmatprep.subr.mxu0 0.0
    %1584 = vmatpush1.msra.mxu0 0.0
    %1585 = vmatprep.subr.mxu0 0.0
    %1586 = vmatpush1.msra.mxu0 0.0
    %1587 = vmatprep.subr.mxu0 0.0
    %1588 = vmatpush1.msra.mxu0 0.0
    %1589 = vmatprep.subr.mxu0 0.0
    %1590 = vmatpush1.msra.mxu0 0.0
    %1591 = vmatprep.subr.mxu0 0.0
    %1592 = vmatpush1.msra.mxu0 0.0
    %1593 = vmatprep.subr.mxu0 0.0
    %1594 = vmatpush1.msra.mxu0 0.0
    %1595 = vmatprep.subr.mxu0 0.0
    %1596 = vmatpush1.msra.mxu0 0.0
    %1597 = vmatprep.subr.mxu0 0.0
    %1598 = vmatpush1.msra.mxu0 0.0
    %1599 = vmatprep.subr.mxu0 0.0
    %1600 = vmatpush1.msra.mxu0 0.0
    %1601 = vmatprep.subr.mxu0 0.0
    %1602 = vmatpush1.msra.mxu0 0.0
    %1603 = vmatprep.subr.mxu0 0.0
    %1604 = vmatpush1.msra.mxu0 0.0
    %1605 = vmatprep.subr.mxu0 0.0
    %1606 = vmatpush1.msra.mxu0 0.0
    %1607 = vmatprep.subr.mxu0 0.0
    %1608 = vmatpush1.msra.mxu0 0.0
    %1609 = vmatprep.mubr.f32.mxu0 0.0
    %1610 = vmatmul.mubr.f32.gmra.mrb[0].mxu0 %v1543
    %v1611 = vpop.f32.mrb[0].mxu0
    %v1612 = vadd.f32 %v1540, %v1611
    %v1613 = vpop.f32.mrb[0].mxu0
    %1614 = vdwg.mxu0
    %1615 = vst.msk [vmem:[#allocation2] sm:$0xff] %vm321, %v1612
    // Predicated region
    $region58: #{gibgcn_forward.1} parent=1 // pred_check
      _
    $region59: #{gibgcn_forward.1} parent=1 // pred_check_branch
      %1617 = sbr.rel (0) target = $region61
    $region60: #{gibgcn_forward.1} parent=1 // pred_region
      %s1619 = ssub.s32 128, 128
      %1620 = vsyncadd [#allocation3], %s1619
      %s1622 = sshll.u32 [#allocation2], 4
      %s1623 = int_to_ptr.vmem [resolvable:$true] %s1622
      %1625 = dma.vmem_to_hbm [thread:$0]  %s1623, 128, %s14, [#allocation3]
    $region61: #{gibgcn_forward.1} parent=1 // pred_fallthru
      _
    // Predicated region
    $region62: #{gibgcn_forward.1} parent=1 // pred_check
      _
    $region63: #{gibgcn_forward.1} parent=1 // pred_check_branch
      %1627 = sbr.rel (0) target = $region65
    $region64: #{gibgcn_forward.1} parent=1 // pred_region
      _
    $region65: #{gibgcn_forward.1} parent=1 // pred_fallthru
      _
    // Predicated region
    $region66: #{gibgcn_forward.1} parent=1 // pred_check
      _
    $region67: #{gibgcn_forward.1} parent=1 // pred_check_branch
      %1629 = sbr.rel (0) target = $region69
    $region68: #{gibgcn_forward.1} parent=1 // pred_region
      _
    $region69: #{gibgcn_forward.1} parent=1 // pred_fallthru
      _
    // Predicated region
    $region70: #{gibgcn_forward.1} parent=1 // pred_check
      _
    $region71: #{gibgcn_forward.1} parent=1 // pred_check_branch
      %1631 = sbr.rel (0) target = $region73
    $region72: #{gibgcn_forward.1} parent=1 // pred_region
      %s1633 = ssub.s32 16, 16
      %1634 = vsyncadd [#allocation5], %s1633
      %s1636 = sshll.u32 [#allocation4], 4
      %s1637 = int_to_ptr.vmem [resolvable:$true] %s1636
      %1639 = dma.vmem_to_hbm [thread:$0]  %s1637, 16, %s17, [#allocation5]
    $region73: #{gibgcn_forward.1} parent=1 // pred_fallthru
      _
    // Predicated region
    $region74: #{gibgcn_forward.1} parent=1 // pred_check
      _
    $region75: #{gibgcn_forward.1} parent=1 // pred_check_branch
      %1641 = sbr.rel (0) target = $region77
    $region76: #{gibgcn_forward.1} parent=1 // pred_region
      %1642 = dma.done [#allocation3], 128
    $region77: #{gibgcn_forward.1} parent=1 // pred_fallthru
      _
    // Predicated region
    $region78: #{gibgcn_forward.1} parent=1 // pred_check
      _
    $region79: #{gibgcn_forward.1} parent=1 // pred_check_branch
      %1644 = sbr.rel (0) target = $region81
    $region80: #{gibgcn_forward.1} parent=1 // pred_region
      _
    $region81: #{gibgcn_forward.1} parent=1 // pred_fallthru
      _
    // Predicated region
    $region82: #{gibgcn_forward.1} parent=1 // pred_check
      _
    $region83: #{gibgcn_forward.1} parent=1 // pred_check_branch
      %1646 = sbr.rel (0) target = $region85
    $region84: #{gibgcn_forward.1} parent=1 // pred_region
      _
    $region85: #{gibgcn_forward.1} parent=1 // pred_fallthru
      _
    // Predicated region
    $region86: #{gibgcn_forward.1} parent=1 // pred_check
      _
    $region87: #{gibgcn_forward.1} parent=1 // pred_check_branch
      %1648 = sbr.rel (0) target = $region89
    $region88: #{gibgcn_forward.1} parent=1 // pred_region
      %1649 = dma.done [#allocation5], 16
    $region89: #{gibgcn_forward.1} parent=1 // pred_fallthru
      _
    %1650 = vsyncpa [#allocation3], 1
    %1651 = vsyncpa [#allocation5], 1

</llo_original>
